<compile_context>
chip_gen: v5e
topology: v5e:2x2
jax: 0.10.0
libtpu: 0.0.40
codegen_flags: <defaults>
</compile_context>

<pallas_src>
import math
from functools import partial

import jax
import jax.numpy as jnp
from jax.experimental import pallas as pl
from jax.experimental.pallas import tpu as pltpu


# --------------------------------- kernel ---------------------------------- #

def _decoder_layer_kernel(
    tgt_ref, mem_ref, qpos_ref, pos_ref,
    sbias_ref, cbias_ref,
    sa_wqk_ref, sa_wv_ref, sa_wo_ref,
    ca_wq_ref, ca_wk_ref, ca_wv_ref, ca_wo_ref,
    w1_ref, w2_ref, vec_ref, b1_ref,
    out_ref, *, nhead, mm_dtype):
    f32 = jnp.float32
    E = tgt_ref.shape[-1]
    Dh = E // nhead
    scale = 1.0 / math.sqrt(Dh)

    def mm(a, b):
        return jnp.dot(a.astype(mm_dtype), b.astype(mm_dtype),
                       preferred_element_type=f32)

    def qk_dot(a, b):  # a:(R,D), b:(C,D) -> (R,C), contraction over last dims
        return jax.lax.dot_general(
            a.astype(mm_dtype), b.astype(mm_dtype),
            dimension_numbers=(((1,), (1,)), ((), ())),
            preferred_element_type=f32)

    def layer_norm(x, w, b, eps=1e-5):
        mu = jnp.mean(x, axis=-1, keepdims=True)
        var = jnp.mean((x - mu) ** 2, axis=-1, keepdims=True)
        return (x - mu) * jax.lax.rsqrt(var + eps) * w + b

    # Static per-head lane masks (constant at compile time, hoisted out of both
    # attention blocks).
    col = jax.lax.broadcasted_iota(jnp.int32, (1, E), 1)
    head_masks = [(col >= h * Dh) & (col < (h + 1) * Dh) for h in range(nhead)]

    def attn_core(Q, K, V, wo, bo, bias):
        # Q: (R, E); K, V: (C, E); bias: (R, C) additive block-diagonal batch mask.
        Qs = Q * scale
        O = jnp.zeros_like(Q)                       # heads land in disjoint lane ranges
        for h in range(nhead):
            m = head_masks[h]                                    # (1, E)
            # (Q*m_h) @ K^T == Q_h @ K_h^T  (other heads' lanes contribute zero)
            s = qk_dot(jnp.where(m, Qs, 0.0), K) + bias          # (R, C)
            s = s - jnp.max(s, axis=-1, keepdims=True)
            p = jnp.exp(s)
            p = p * pl.reciprocal(jnp.sum(p, axis=-1, keepdims=True), approx=True)
            # p @ (V*m_h) writes head h's output into its own lane range of O.
            O = O + mm(p, jnp.where(m, V, 0.0))
        return mm(O, wo) + bo                        # single output projection

    tgt = tgt_ref[...].astype(f32)     # (R, E), R = L*N, row = l*N + n
    mem = mem_ref[...].astype(f32)     # (C, E), C = S*N
    qpos = qpos_ref[...].astype(f32)
    pos = pos_ref[...].astype(f32)
    sbias = sbias_ref[...]
    cbias = cbias_ref[...]

    # --- self-attention block (q = k = tgt + query_pos, v = tgt) ---
    xq = tgt + qpos
    qk = mm(xq, sa_wqk_ref[...])                     # fused Q,K projection -> (R, 2E)
    Q = qk[:, :E] + vec_ref[0]
    K = qk[:, E:] + vec_ref[1]
    V = mm(tgt, sa_wv_ref[...]) + vec_ref[2]
    sa = attn_core(Q, K, V, sa_wo_ref[...], vec_ref[3], sbias)
    x = layer_norm(tgt + sa, vec_ref[8], vec_ref[9])

    # --- cross-attention block (q = x + query_pos, k = memory + pos, v = memory) ---
    Qc = mm(x + qpos, ca_wq_ref[...]) + vec_ref[4]
    Kc = mm(mem + pos, ca_wk_ref[...]) + vec_ref[5]
    Vc = mm(mem, ca_wv_ref[...]) + vec_ref[6]
    ca = attn_core(Qc, Kc, Vc, ca_wo_ref[...], vec_ref[7], cbias)
    x = layer_norm(x + ca, vec_ref[10], vec_ref[11])

    # --- feed-forward block (linear1 -> relu -> linear2) ---
    h = jnp.maximum(mm(x, w1_ref[...]) + b1_ref[0], 0.0)
    y = mm(h, w2_ref[...]) + vec_ref[14]
    x = layer_norm(x + y, vec_ref[12], vec_ref[13])

    out_ref[...] = x.astype(out_ref.dtype)


# -------------------------------- wrapper ---------------------------------- #

def transformer_decoder_layer(tgt, memory, params, nhead,
                              query_pos=None, pos=None,
                              matmul_dtype=jnp.bfloat16):
    """tgt: (L, N, E), memory: (S, N, E) -- PyTorch seq-first layout."""
    L, N, E = tgt.shape
    S = memory.shape[0]
    F = params["w1"].shape[0]

    if query_pos is None:
        query_pos = jnp.zeros_like(tgt)
    if pos is None:
        pos = jnp.zeros_like(memory)

    R = L * N            # query rows,  row r -> (l = r // N, batch = r % N)
    C = S * N            # memory rows

    # Contiguous reshapes only (free) -- no transposes / extra HBM passes.
    tgt2 = tgt.reshape(R, E)
    mem2 = memory.reshape(C, E)
    qpos2 = query_pos.reshape(R, E)
    pos2 = pos.reshape(C, E)

    # Additive score biases that keep attention block-diagonal over the batch.
    neg = jnp.float32(-1e30)
    rb = jnp.arange(R, dtype=jnp.int32) % N
    cb = jnp.arange(C, dtype=jnp.int32) % N
    self_bias = jnp.where(rb[:, None] == rb[None, :], 0.0, neg).astype(jnp.float32)
    cross_bias = jnp.where(rb[:, None] == cb[None, :], 0.0, neg).astype(jnp.float32)

    p = params
    wt = lambda w: jnp.asarray(w).T.astype(matmul_dtype)      # pre-transpose: x @ W
    sa_wq, sa_wk, sa_wv = p["sa_in_w"][:E], p["sa_in_w"][E:2 * E], p["sa_in_w"][2 * E:]
    ca_wq, ca_wk, ca_wv = p["ca_in_w"][:E], p["ca_in_w"][E:2 * E], p["ca_in_w"][2 * E:]
    weights = [
        jnp.concatenate([sa_wq.T, sa_wk.T], axis=1).astype(matmul_dtype),  # (E, 2E)
        wt(sa_wv), wt(p["sa_out_w"]),
        wt(ca_wq), wt(ca_wk), wt(ca_wv), wt(p["ca_out_w"]),
        wt(p["w1"]), wt(p["w2"]),
    ]

    # Pack all E-wide bias / LayerNorm vectors into one (16, E) array.
    vec_pack = jnp.stack([
        p["sa_in_b"][:E], p["sa_in_b"][E:2 * E], p["sa_in_b"][2 * E:], p["sa_out_b"],
        p["ca_in_b"][:E], p["ca_in_b"][E:2 * E], p["ca_in_b"][2 * E:], p["ca_out_b"],
        p["ln1_w"], p["ln1_b"], p["ln2_w"], p["ln2_b"], p["ln3_w"], p["ln3_b"],
        p["b2"], jnp.zeros((E,), jnp.float32),
    ], axis=0).astype(jnp.float32)
    b1 = p["b1"].astype(jnp.float32).reshape(1, F)

    inputs = [tgt2, mem2, qpos2, pos2, self_bias, cross_bias] + weights + [vec_pack, b1]

    def full_spec(arr):
        nd = arr.ndim
        return pl.BlockSpec(arr.shape, lambda i, _nd=nd: (0,) * _nd)

    # Single grid step: whole problem fits in VMEM (a few 10s of KiB at these sizes).
    # For large N on v7x (2 TCs), one would reintroduce a row-block grid marked
    # "parallel"; at N=2 with 1 TC on v5e/v6e the fused single step is best.
    out2 = pl.pallas_call(
        partial(_decoder_layer_kernel, nhead=nhead, mm_dtype=matmul_dtype),
        out_shape=jax.ShapeDtypeStruct((R, E), jnp.float32),
        grid_spec=pltpu.PrefetchScalarGridSpec(
            num_scalar_prefetch=0,
            grid=(1,),
            in_specs=[full_spec(a) for a in inputs],
            out_specs=pl.BlockSpec((R, E), lambda i: (0, 0)),
        ),
        compiler_params=pltpu.CompilerParams(
            dimension_semantics=("arbitrary",)),
    )(*inputs)

    return out2.reshape(L, N, E)


# ------------------------ pure-JAX reference (check) ------------------------ #

def _reference(tgt, memory, params, nhead, query_pos, pos):
    """Independent f32 re-implementation of PyTorch MultiheadAttention semantics."""
    E = tgt.shape[-1]
    Dh = E // nhead

    def mha(q, k, v, in_w, in_b, out_w, out_b):
        Wq, Wk, Wv = in_w[:E], in_w[E:2 * E], in_w[2 * E:]
        bq, bk, bv = in_b[:E], in_b[E:2 * E], in_b[2 * E:]
        Q = q @ Wq.T + bq
        K = k @ Wk.T + bk
        V = v @ Wv.T + bv
        Lq, N, _ = Q.shape
        Lk = K.shape[0]
        Qh = Q.reshape(Lq, N, nhead, Dh) / math.sqrt(Dh)
        Kh = K.reshape(Lk, N, nhead, Dh)
        Vh = V.reshape(Lk, N, nhead, Dh)
        s = jnp.einsum('qnhd,knhd->nhqk', Qh, Kh)
        p_attn = jax.nn.softmax(s, axis=-1)
        o = jnp.einsum('nhqk,knhd->qnhd', p_attn, Vh).reshape(Lq, N, E)
        return o @ out_w.T + out_b

    def ln(x, w, b, eps=1e-5):
        mu = x.mean(-1, keepdims=True)
        var = ((x - mu) ** 2).mean(-1, keepdims=True)
        return (x - mu) / jnp.sqrt(var + eps) * w + b

    prm = params
    q = tgt + query_pos
    sa = mha(q, q, tgt, prm["sa_in_w"], prm["sa_in_b"],
             prm["sa_out_w"], prm["sa_out_b"])
    x = ln(tgt + sa, prm["ln1_w"], prm["ln1_b"])
    ca = mha(x + query_pos, memory + pos, memory,
             prm["ca_in_w"], prm["ca_in_b"], prm["ca_out_w"], prm["ca_out_b"])
    x = ln(x + ca, prm["ln2_w"], prm["ln2_b"])
    h = jax.nn.relu(x @ prm["w1"].T + prm["b1"])
    y = h @ prm["w2"].T + prm["b2"]
    return ln(x + y, prm["ln3_w"], prm["ln3_b"])


# ----------------------------------- main ----------------------------------- #

def _init_params(key, d_model, nhead, dim_feedforward):
    ks = jax.random.split(key, 12)
    s = 0.05
    return {
        "sa_in_w": jax.random.normal(ks[0], (3 * d_model, d_model), jnp.float32) * s,
        "sa_in_b": jax.random.normal(ks[1], (3 * d_model,), jnp.float32) * s,
        "sa_out_w": jax.random.normal(ks[2], (d_model, d_model), jnp.float32) * s,
        "sa_out_b": jax.random.normal(ks[3], (d_model,), jnp.float32) * s,
        "ca_in_w": jax.random.normal(ks[4], (3 * d_model, d_model), jnp.float32) * s,
        "ca_in_b": jax.random.normal(ks[5], (3 * d_model,), jnp.float32) * s,
        "ca_out_w": jax.random.normal(ks[6], (d_model, d_model), jnp.float32) * s,
        "ca_out_b": jax.random.normal(ks[7], (d_model,), jnp.float32) * s,
        "ln1_w": jnp.ones((d_model,), jnp.float32),
        "ln1_b": jnp.zeros((d_model,), jnp.float32),
        "ln2_w": jnp.ones((d_model,), jnp.float32),
        "ln2_b": jnp.zeros((d_model,), jnp.float32),
        "ln3_w": jnp.ones((d_model,), jnp.float32),
        "ln3_b": jnp.zeros((d_model,), jnp.float32),
        "w1": jax.random.normal(ks[8], (dim_feedforward, d_model), jnp.float32) * s,
        "b1": jax.random.normal(ks[9], (dim_feedforward,), jnp.float32) * s,
        "w2": jax.random.normal(ks[10], (d_model, dim_feedforward), jnp.float32) * s,
        "b2": jax.random.normal(ks[11], (d_model,), jnp.float32) * s,
    }


if __name__ == "__main__":
    d_model, nhead, dim_feedforward = 32, 4, 64
    L, S, N = 8, 12, 2   # tgt length, memory length, batch

    key = jax.random.PRNGKey(0)
    kp, kt, km, kq, kpo = jax.random.split(key, 5)

    params = _init_params(kp, d_model, nhead, dim_feedforward)
    tgt = jax.random.normal(kt, (L, N, d_model), jnp.float32)
    memory = jax.random.normal(km, (S, N, d_model), jnp.float32)
    query_pos = jax.random.normal(kq, (L, N, d_model), jnp.float32)
    pos = jax.random.normal(kpo, (S, N, d_model), jnp.float32)

    out = transformer_decoder_layer(tgt, memory, params, nhead,
                                    query_pos=query_pos, pos=pos)
    out = jax.block_until_ready(out)

    ref = _reference(tgt, memory, params, nhead, query_pos, pos)
    assert out.shape == (L, N, d_model)
    err = float(jnp.max(jnp.abs(out - ref)))
    # bf16 matmul operands + approx reciprocal vs. f32 reference -> loose tolerance;
    # plumbing bugs would produce O(1) errors.
    assert err < 5e-2, err

    print("KERNEL_OK")
</pallas_src>

<mosaic_0001>
module attributes {stable_mosaic.version = 11 : i64} {
  func.func @_decoder_layer_kernel(%arg0: i32, %arg1: memref<16x32xf32, #tpu.memory_space<vmem>>, %arg2: memref<24x32xf32, #tpu.memory_space<vmem>>, %arg3: memref<16x32xf32, #tpu.memory_space<vmem>>, %arg4: memref<24x32xf32, #tpu.memory_space<vmem>>, %arg5: memref<16x16xf32, #tpu.memory_space<vmem>>, %arg6: memref<16x24xf32, #tpu.memory_space<vmem>>, %arg7: memref<32x64xbf16, #tpu.memory_space<vmem>>, %arg8: memref<32x32xbf16, #tpu.memory_space<vmem>>, %arg9: memref<32x32xbf16, #tpu.memory_space<vmem>>, %arg10: memref<32x32xbf16, #tpu.memory_space<vmem>>, %arg11: memref<32x32xbf16, #tpu.memory_space<vmem>>, %arg12: memref<32x32xbf16, #tpu.memory_space<vmem>>, %arg13: memref<32x32xbf16, #tpu.memory_space<vmem>>, %arg14: memref<32x64xbf16, #tpu.memory_space<vmem>>, %arg15: memref<64x32xbf16, #tpu.memory_space<vmem>>, %arg16: memref<16x32xf32, #tpu.memory_space<vmem>>, %arg17: memref<1x64xf32, #tpu.memory_space<vmem>>, %arg18: memref<16x32xf32, #tpu.memory_space<vmem>>) attributes {dimension_semantics = [#tpu.dimension_semantics<arbitrary>], iteration_bounds = array<i64: 1>, scalar_prefetch = 0 : i64, scratch_operands = 0 : i64, tpu.core_type = #tpu.core_type<tc>, window_params = [{pipeline_mode = #tpu.pipeline_mode<synchronous>, transform_indices = @transform_0, window_bounds = array<i64: 16, 32>}, {pipeline_mode = #tpu.pipeline_mode<synchronous>, transform_indices = @transform_1, window_bounds = array<i64: 24, 32>}, {pipeline_mode = #tpu.pipeline_mode<synchronous>, transform_indices = @transform_2, window_bounds = array<i64: 16, 32>}, {pipeline_mode = #tpu.pipeline_mode<synchronous>, transform_indices = @transform_3, window_bounds = array<i64: 24, 32>}, {pipeline_mode = #tpu.pipeline_mode<synchronous>, transform_indices = @transform_4, window_bounds = array<i64: 16, 16>}, {pipeline_mode = #tpu.pipeline_mode<synchronous>, transform_indices = @transform_5, window_bounds = array<i64: 16, 24>}, {pipeline_mode = #tpu.pipeline_mode<synchronous>, transform_indices = @transform_6, window_bounds = array<i64: 32, 64>}, {pipeline_mode = #tpu.pipeline_mode<synchronous>, transform_indices = @transform_7, window_bounds = array<i64: 32, 32>}, {pipeline_mode = #tpu.pipeline_mode<synchronous>, transform_indices = @transform_8, window_bounds = array<i64: 32, 32>}, {pipeline_mode = #tpu.pipeline_mode<synchronous>, transform_indices = @transform_9, window_bounds = array<i64: 32, 32>}, {pipeline_mode = #tpu.pipeline_mode<synchronous>, transform_indices = @transform_10, window_bounds = array<i64: 32, 32>}, {pipeline_mode = #tpu.pipeline_mode<synchronous>, transform_indices = @transform_11, window_bounds = array<i64: 32, 32>}, {pipeline_mode = #tpu.pipeline_mode<synchronous>, transform_indices = @transform_12, window_bounds = array<i64: 32, 32>}, {pipeline_mode = #tpu.pipeline_mode<synchronous>, transform_indices = @transform_13, window_bounds = array<i64: 32, 64>}, {pipeline_mode = #tpu.pipeline_mode<synchronous>, transform_indices = @transform_14, window_bounds = array<i64: 64, 32>}, {pipeline_mode = #tpu.pipeline_mode<synchronous>, transform_indices = @transform_15, window_bounds = array<i64: 16, 32>}, {pipeline_mode = #tpu.pipeline_mode<synchronous>, transform_indices = @transform_16, window_bounds = array<i64: 1, 64>}, {pipeline_mode = #tpu.pipeline_mode<synchronous>, transform_indices = @transform_17, window_bounds = array<i64: 16, 32>}]} {
    %0 = tpu.iota {dimensions = array<i32: 1>} : vector<1x32xi32>
    %c0_i32 = arith.constant 0 : i32
    %1 = vector.broadcast %c0_i32 : i32 to vector<1x32xi32>
    %2 = arith.cmpi sge, %0, %1 : vector<1x32xi32>
    %c8_i32 = arith.constant 8 : i32
    %3 = vector.broadcast %c8_i32 : i32 to vector<1x32xi32>
    %4 = arith.cmpi slt, %0, %3 : vector<1x32xi32>
    %5 = arith.andi %2, %4 : vector<1x32xi1>
    %c8_i32_0 = arith.constant 8 : i32
    %6 = vector.broadcast %c8_i32_0 : i32 to vector<1x32xi32>
    %7 = arith.cmpi sge, %0, %6 : vector<1x32xi32>
    %c16_i32 = arith.constant 16 : i32
    %8 = vector.broadcast %c16_i32 : i32 to vector<1x32xi32>
    %9 = arith.cmpi slt, %0, %8 : vector<1x32xi32>
    %10 = arith.andi %7, %9 : vector<1x32xi1>
    %c16_i32_1 = arith.constant 16 : i32
    %11 = vector.broadcast %c16_i32_1 : i32 to vector<1x32xi32>
    %12 = arith.cmpi sge, %0, %11 : vector<1x32xi32>
    %c24_i32 = arith.constant 24 : i32
    %13 = vector.broadcast %c24_i32 : i32 to vector<1x32xi32>
    %14 = arith.cmpi slt, %0, %13 : vector<1x32xi32>
    %15 = arith.andi %12, %14 : vector<1x32xi1>
    %c24_i32_2 = arith.constant 24 : i32
    %16 = vector.broadcast %c24_i32_2 : i32 to vector<1x32xi32>
    %17 = arith.cmpi sge, %0, %16 : vector<1x32xi32>
    %c32_i32 = arith.constant 32 : i32
    %18 = vector.broadcast %c32_i32 : i32 to vector<1x32xi32>
    %19 = arith.cmpi slt, %0, %18 : vector<1x32xi32>
    %20 = arith.andi %17, %19 : vector<1x32xi1>
    %c0 = arith.constant 0 : index
    %c0_3 = arith.constant 0 : index
    %21 = vector.load %arg1[%c0, %c0_3] : memref<16x32xf32, #tpu.memory_space<vmem>>, vector<16x32xf32>
    %c0_4 = arith.constant 0 : index
    %c0_5 = arith.constant 0 : index
    %22 = vector.load %arg2[%c0_4, %c0_5] : memref<24x32xf32, #tpu.memory_space<vmem>>, vector<24x32xf32>
    %c0_6 = arith.constant 0 : index
    %c0_7 = arith.constant 0 : index
    %23 = vector.load %arg3[%c0_6, %c0_7] : memref<16x32xf32, #tpu.memory_space<vmem>>, vector<16x32xf32>
    %c0_8 = arith.constant 0 : index
    %c0_9 = arith.constant 0 : index
    %24 = vector.load %arg4[%c0_8, %c0_9] : memref<24x32xf32, #tpu.memory_space<vmem>>, vector<24x32xf32>
    %c0_10 = arith.constant 0 : index
    %c0_11 = arith.constant 0 : index
    %25 = vector.load %arg5[%c0_10, %c0_11] : memref<16x16xf32, #tpu.memory_space<vmem>>, vector<16x16xf32>
    %c0_12 = arith.constant 0 : index
    %c0_13 = arith.constant 0 : index
    %26 = vector.load %arg6[%c0_12, %c0_13] : memref<16x24xf32, #tpu.memory_space<vmem>>, vector<16x24xf32>
    %27 = arith.addf %21, %23 : vector<16x32xf32>
    %c0_14 = arith.constant 0 : index
    %c0_15 = arith.constant 0 : index
    %28 = vector.load %arg7[%c0_14, %c0_15] : memref<32x64xbf16, #tpu.memory_space<vmem>>, vector<32x64xbf16>
    %29 = arith.truncf %27 : vector<16x32xf32> to vector<16x32xbf16>
    %cst = arith.constant dense<0.000000e+00> : vector<16x64xf32>
    %30 = tpu.matmul %29, %28, %cst {dimension_numbers = #tpu.dot_dimension_numbers<[1], [0], [0], [1], [0, 0, 1, 1], [], []>} : vector<16x32xbf16>, vector<32x64xbf16>, vector<16x64xf32> -> vector<16x64xf32>
    %31 = vector.extract_strided_slice %30 {offsets = [0, 0], sizes = [16, 32], strides = [1, 1]} : vector<16x64xf32> to vector<16x32xf32>
    %c0_16 = arith.constant 0 : index
    %c0_17 = arith.constant 0 : index
    %32 = vector.load %arg16[%c0_16, %c0_17] : memref<16x32xf32, #tpu.memory_space<vmem>>, vector<1x32xf32>
    %33 = vector.shape_cast %32 : vector<1x32xf32> to vector<32xf32>
    %34 = vector.shape_cast %33 : vector<32xf32> to vector<1x32xf32>
    %35 = vector.broadcast %34 : vector<1x32xf32> to vector<16x32xf32>
    %36 = arith.addf %31, %35 : vector<16x32xf32>
    %37 = vector.extract_strided_slice %30 {offsets = [0, 32], sizes = [16, 32], strides = [1, 1]} : vector<16x64xf32> to vector<16x32xf32>
    %c1 = arith.constant 1 : index
    %c0_18 = arith.constant 0 : index
    %38 = vector.load %arg16[%c1, %c0_18] : memref<16x32xf32, #tpu.memory_space<vmem>>, vector<1x32xf32>
    %39 = vector.shape_cast %38 : vector<1x32xf32> to vector<32xf32>
    %40 = vector.shape_cast %39 : vector<32xf32> to vector<1x32xf32>
    %41 = vector.broadcast %40 : vector<1x32xf32> to vector<16x32xf32>
    %42 = arith.addf %37, %41 : vector<16x32xf32>
    %c0_19 = arith.constant 0 : index
    %c0_20 = arith.constant 0 : index
    %43 = vector.load %arg8[%c0_19, %c0_20] : memref<32x32xbf16, #tpu.memory_space<vmem>>, vector<32x32xbf16>
    %44 = arith.truncf %21 : vector<16x32xf32> to vector<16x32xbf16>
    %cst_21 = arith.constant dense<0.000000e+00> : vector<16x32xf32>
    %45 = tpu.matmul %44, %43, %cst_21 {dimension_numbers = #tpu.dot_dimension_numbers<[1], [0], [0], [1], [0, 0, 1, 1], [], []>} : vector<16x32xbf16>, vector<32x32xbf16>, vector<16x32xf32> -> vector<16x32xf32>
    %c2 = arith.constant 2 : index
    %c0_22 = arith.constant 0 : index
    %46 = vector.load %arg16[%c2, %c0_22] : memref<16x32xf32, #tpu.memory_space<vmem>>, vector<1x32xf32>
    %47 = vector.shape_cast %46 : vector<1x32xf32> to vector<32xf32>
    %48 = vector.shape_cast %47 : vector<32xf32> to vector<1x32xf32>
    %49 = vector.broadcast %48 : vector<1x32xf32> to vector<16x32xf32>
    %50 = arith.addf %45, %49 : vector<16x32xf32>
    %c0_23 = arith.constant 0 : index
    %c0_24 = arith.constant 0 : index
    %51 = vector.load %arg9[%c0_23, %c0_24] : memref<32x32xbf16, #tpu.memory_space<vmem>>, vector<32x32xbf16>
    %c3 = arith.constant 3 : index
    %c0_25 = arith.constant 0 : index
    %52 = vector.load %arg16[%c3, %c0_25] : memref<16x32xf32, #tpu.memory_space<vmem>>, vector<1x32xf32>
    %53 = vector.shape_cast %52 : vector<1x32xf32> to vector<32xf32>
    %cst_26 = arith.constant 0.353553385 : f32
    %54 = vector.broadcast %cst_26 : f32 to vector<16x32xf32>
    %55 = arith.mulf %36, %54 : vector<16x32xf32>
    %cst_27 = arith.constant 0.000000e+00 : f32
    %56 = vector.broadcast %cst_27 : f32 to vector<16x32xf32>
    %cst_28 = arith.constant 0.000000e+00 : f32
    %57 = vector.shape_cast %5 : vector<1x32xi1> to vector<1x32xi1>
    %58 = vector.broadcast %57 : vector<1x32xi1> to vector<16x32xi1>
    %59 = vector.broadcast %cst_28 : f32 to vector<16x32xf32>
    %60 = arith.select %58, %55, %59 : vector<16x32xi1>, vector<16x32xf32>
    %61 = arith.truncf %60 : vector<16x32xf32> to vector<16x32xbf16>
    %62 = arith.truncf %42 : vector<16x32xf32> to vector<16x32xbf16>
    %cst_29 = arith.constant dense<0.000000e+00> : vector<16x16xf32>
    %63 = tpu.matmul %61, %62, %cst_29 {dimension_numbers = #tpu.dot_dimension_numbers<[1], [1], [0], [0], [0, 0, 1, 0], [], []>} : vector<16x32xbf16>, vector<16x32xbf16>, vector<16x16xf32> -> vector<16x16xf32>
    %64 = arith.addf %63, %25 : vector<16x16xf32>
    %cst_30 = arith.constant dense<0xFF800000> : vector<16xf32>
    %65 = vector.multi_reduction <maximumf>, %64, %cst_30 [1] : vector<16x16xf32> to vector<16xf32>
    %66 = vector.shape_cast %65 : vector<16xf32> to vector<16x1xf32>
    %67 = vector.broadcast %66 : vector<16x1xf32> to vector<16x16xf32>
    %68 = arith.subf %64, %67 : vector<16x16xf32>
    %69 = math.exp %68 : vector<16x16xf32>
    %cst_31 = arith.constant dense<0.000000e+00> : vector<16xf32>
    %70 = vector.multi_reduction <add>, %69, %cst_31 [1] : vector<16x16xf32> to vector<16xf32>
    %71 = vector.shape_cast %70 : vector<16xf32> to vector<16x1xf32>
    %72 = tpu.reciprocal %71 {approx = true} : vector<16x1xf32> -> vector<16x1xf32>
    %73 = vector.broadcast %72 : vector<16x1xf32> to vector<16x16xf32>
    %74 = arith.mulf %69, %73 : vector<16x16xf32>
    %cst_32 = arith.constant 0.000000e+00 : f32
    %75 = vector.shape_cast %5 : vector<1x32xi1> to vector<1x32xi1>
    %76 = vector.broadcast %75 : vector<1x32xi1> to vector<16x32xi1>
    %77 = vector.broadcast %cst_32 : f32 to vector<16x32xf32>
    %78 = arith.select %76, %50, %77 : vector<16x32xi1>, vector<16x32xf32>
    %79 = arith.truncf %74 : vector<16x16xf32> to vector<16x16xbf16>
    %80 = arith.truncf %78 : vector<16x32xf32> to vector<16x32xbf16>
    %cst_33 = arith.constant dense<0.000000e+00> : vector<16x32xf32>
    %81 = tpu.matmul %79, %80, %cst_33 {dimension_numbers = #tpu.dot_dimension_numbers<[1], [0], [0], [1], [0, 0, 1, 1], [], []>} : vector<16x16xbf16>, vector<16x32xbf16>, vector<16x32xf32> -> vector<16x32xf32>
    %82 = arith.addf %56, %81 : vector<16x32xf32>
    %cst_34 = arith.constant 0.000000e+00 : f32
    %83 = vector.shape_cast %10 : vector<1x32xi1> to vector<1x32xi1>
    %84 = vector.broadcast %83 : vector<1x32xi1> to vector<16x32xi1>
    %85 = vector.broadcast %cst_34 : f32 to vector<16x32xf32>
    %86 = arith.select %84, %55, %85 : vector<16x32xi1>, vector<16x32xf32>
    %87 = arith.truncf %86 : vector<16x32xf32> to vector<16x32xbf16>
    %88 = arith.truncf %42 : vector<16x32xf32> to vector<16x32xbf16>
    %cst_35 = arith.constant dense<0.000000e+00> : vector<16x16xf32>
    %89 = tpu.matmul %87, %88, %cst_35 {dimension_numbers = #tpu.dot_dimension_numbers<[1], [1], [0], [0], [0, 0, 1, 0], [], []>} : vector<16x32xbf16>, vector<16x32xbf16>, vector<16x16xf32> -> vector<16x16xf32>
    %90 = arith.addf %89, %25 : vector<16x16xf32>
    %cst_36 = arith.constant dense<0xFF800000> : vector<16xf32>
    %91 = vector.multi_reduction <maximumf>, %90, %cst_36 [1] : vector<16x16xf32> to vector<16xf32>
    %92 = vector.shape_cast %91 : vector<16xf32> to vector<16x1xf32>
    %93 = vector.broadcast %92 : vector<16x1xf32> to vector<16x16xf32>
    %94 = arith.subf %90, %93 : vector<16x16xf32>
    %95 = math.exp %94 : vector<16x16xf32>
    %cst_37 = arith.constant dense<0.000000e+00> : vector<16xf32>
    %96 = vector.multi_reduction <add>, %95, %cst_37 [1] : vector<16x16xf32> to vector<16xf32>
    %97 = vector.shape_cast %96 : vector<16xf32> to vector<16x1xf32>
    %98 = tpu.reciprocal %97 {approx = true} : vector<16x1xf32> -> vector<16x1xf32>
    %99 = vector.broadcast %98 : vector<16x1xf32> to vector<16x16xf32>
    %100 = arith.mulf %95, %99 : vector<16x16xf32>
    %cst_38 = arith.constant 0.000000e+00 : f32
    %101 = vector.shape_cast %10 : vector<1x32xi1> to vector<1x32xi1>
    %102 = vector.broadcast %101 : vector<1x32xi1> to vector<16x32xi1>
    %103 = vector.broadcast %cst_38 : f32 to vector<16x32xf32>
    %104 = arith.select %102, %50, %103 : vector<16x32xi1>, vector<16x32xf32>
    %105 = arith.truncf %100 : vector<16x16xf32> to vector<16x16xbf16>
    %106 = arith.truncf %104 : vector<16x32xf32> to vector<16x32xbf16>
    %cst_39 = arith.constant dense<0.000000e+00> : vector<16x32xf32>
    %107 = tpu.matmul %105, %106, %cst_39 {dimension_numbers = #tpu.dot_dimension_numbers<[1], [0], [0], [1], [0, 0, 1, 1], [], []>} : vector<16x16xbf16>, vector<16x32xbf16>, vector<16x32xf32> -> vector<16x32xf32>
    %108 = arith.addf %82, %107 : vector<16x32xf32>
    %cst_40 = arith.constant 0.000000e+00 : f32
    %109 = vector.shape_cast %15 : vector<1x32xi1> to vector<1x32xi1>
    %110 = vector.broadcast %109 : vector<1x32xi1> to vector<16x32xi1>
    %111 = vector.broadcast %cst_40 : f32 to vector<16x32xf32>
    %112 = arith.select %110, %55, %111 : vector<16x32xi1>, vector<16x32xf32>
    %113 = arith.truncf %112 : vector<16x32xf32> to vector<16x32xbf16>
    %114 = arith.truncf %42 : vector<16x32xf32> to vector<16x32xbf16>
    %cst_41 = arith.constant dense<0.000000e+00> : vector<16x16xf32>
    %115 = tpu.matmul %113, %114, %cst_41 {dimension_numbers = #tpu.dot_dimension_numbers<[1], [1], [0], [0], [0, 0, 1, 0], [], []>} : vector<16x32xbf16>, vector<16x32xbf16>, vector<16x16xf32> -> vector<16x16xf32>
    %116 = arith.addf %115, %25 : vector<16x16xf32>
    %cst_42 = arith.constant dense<0xFF800000> : vector<16xf32>
    %117 = vector.multi_reduction <maximumf>, %116, %cst_42 [1] : vector<16x16xf32> to vector<16xf32>
    %118 = vector.shape_cast %117 : vector<16xf32> to vector<16x1xf32>
    %119 = vector.broadcast %118 : vector<16x1xf32> to vector<16x16xf32>
    %120 = arith.subf %116, %119 : vector<16x16xf32>
    %121 = math.exp %120 : vector<16x16xf32>
    %cst_43 = arith.constant dense<0.000000e+00> : vector<16xf32>
    %122 = vector.multi_reduction <add>, %121, %cst_43 [1] : vector<16x16xf32> to vector<16xf32>
    %123 = vector.shape_cast %122 : vector<16xf32> to vector<16x1xf32>
    %124 = tpu.reciprocal %123 {approx = true} : vector<16x1xf32> -> vector<16x1xf32>
    %125 = vector.broadcast %124 : vector<16x1xf32> to vector<16x16xf32>
    %126 = arith.mulf %121, %125 : vector<16x16xf32>
    %cst_44 = arith.constant 0.000000e+00 : f32
    %127 = vector.shape_cast %15 : vector<1x32xi1> to vector<1x32xi1>
    %128 = vector.broadcast %127 : vector<1x32xi1> to vector<16x32xi1>
    %129 = vector.broadcast %cst_44 : f32 to vector<16x32xf32>
    %130 = arith.select %128, %50, %129 : vector<16x32xi1>, vector<16x32xf32>
    %131 = arith.truncf %126 : vector<16x16xf32> to vector<16x16xbf16>
    %132 = arith.truncf %130 : vector<16x32xf32> to vector<16x32xbf16>
    %cst_45 = arith.constant dense<0.000000e+00> : vector<16x32xf32>
    %133 = tpu.matmul %131, %132, %cst_45 {dimension_numbers = #tpu.dot_dimension_numbers<[1], [0], [0], [1], [0, 0, 1, 1], [], []>} : vector<16x16xbf16>, vector<16x32xbf16>, vector<16x32xf32> -> vector<16x32xf32>
    %134 = arith.addf %108, %133 : vector<16x32xf32>
    %cst_46 = arith.constant 0.000000e+00 : f32
    %135 = vector.shape_cast %20 : vector<1x32xi1> to vector<1x32xi1>
    %136 = vector.broadcast %135 : vector<1x32xi1> to vector<16x32xi1>
    %137 = vector.broadcast %cst_46 : f32 to vector<16x32xf32>
    %138 = arith.select %136, %55, %137 : vector<16x32xi1>, vector<16x32xf32>
    %139 = arith.truncf %138 : vector<16x32xf32> to vector<16x32xbf16>
    %140 = arith.truncf %42 : vector<16x32xf32> to vector<16x32xbf16>
    %cst_47 = arith.constant dense<0.000000e+00> : vector<16x16xf32>
    %141 = tpu.matmul %139, %140, %cst_47 {dimension_numbers = #tpu.dot_dimension_numbers<[1], [1], [0], [0], [0, 0, 1, 0], [], []>} : vector<16x32xbf16>, vector<16x32xbf16>, vector<16x16xf32> -> vector<16x16xf32>
    %142 = arith.addf %141, %25 : vector<16x16xf32>
    %cst_48 = arith.constant dense<0xFF800000> : vector<16xf32>
    %143 = vector.multi_reduction <maximumf>, %142, %cst_48 [1] : vector<16x16xf32> to vector<16xf32>
    %144 = vector.shape_cast %143 : vector<16xf32> to vector<16x1xf32>
    %145 = vector.broadcast %144 : vector<16x1xf32> to vector<16x16xf32>
    %146 = arith.subf %142, %145 : vector<16x16xf32>
    %147 = math.exp %146 : vector<16x16xf32>
    %cst_49 = arith.constant dense<0.000000e+00> : vector<16xf32>
    %148 = vector.multi_reduction <add>, %147, %cst_49 [1] : vector<16x16xf32> to vector<16xf32>
    %149 = vector.shape_cast %148 : vector<16xf32> to vector<16x1xf32>
    %150 = tpu.reciprocal %149 {approx = true} : vector<16x1xf32> -> vector<16x1xf32>
    %151 = vector.broadcast %150 : vector<16x1xf32> to vector<16x16xf32>
    %152 = arith.mulf %147, %151 : vector<16x16xf32>
    %cst_50 = arith.constant 0.000000e+00 : f32
    %153 = vector.shape_cast %20 : vector<1x32xi1> to vector<1x32xi1>
    %154 = vector.broadcast %153 : vector<1x32xi1> to vector<16x32xi1>
    %155 = vector.broadcast %cst_50 : f32 to vector<16x32xf32>
    %156 = arith.select %154, %50, %155 : vector<16x32xi1>, vector<16x32xf32>
    %157 = arith.truncf %152 : vector<16x16xf32> to vector<16x16xbf16>
    %158 = arith.truncf %156 : vector<16x32xf32> to vector<16x32xbf16>
    %cst_51 = arith.constant dense<0.000000e+00> : vector<16x32xf32>
    %159 = tpu.matmul %157, %158, %cst_51 {dimension_numbers = #tpu.dot_dimension_numbers<[1], [0], [0], [1], [0, 0, 1, 1], [], []>} : vector<16x16xbf16>, vector<16x32xbf16>, vector<16x32xf32> -> vector<16x32xf32>
    %160 = arith.addf %134, %159 : vector<16x32xf32>
    %161 = arith.truncf %160 : vector<16x32xf32> to vector<16x32xbf16>
    %cst_52 = arith.constant dense<0.000000e+00> : vector<16x32xf32>
    %162 = tpu.matmul %161, %51, %cst_52 {dimension_numbers = #tpu.dot_dimension_numbers<[1], [0], [0], [1], [0, 0, 1, 1], [], []>} : vector<16x32xbf16>, vector<32x32xbf16>, vector<16x32xf32> -> vector<16x32xf32>
    %163 = vector.shape_cast %53 : vector<32xf32> to vector<1x32xf32>
    %164 = vector.broadcast %163 : vector<1x32xf32> to vector<16x32xf32>
    %165 = arith.addf %162, %164 : vector<16x32xf32>
    %166 = arith.addf %21, %165 : vector<16x32xf32>
    %c8 = arith.constant 8 : index
    %c0_53 = arith.constant 0 : index
    %167 = vector.load %arg16[%c8, %c0_53] : memref<16x32xf32, #tpu.memory_space<vmem>>, vector<1x32xf32>
    %168 = vector.shape_cast %167 : vector<1x32xf32> to vector<32xf32>
    %c9 = arith.constant 9 : index
    %c0_54 = arith.constant 0 : index
    %169 = vector.load %arg16[%c9, %c0_54] : memref<16x32xf32, #tpu.memory_space<vmem>>, vector<1x32xf32>
    %170 = vector.shape_cast %169 : vector<1x32xf32> to vector<32xf32>
    %cst_55 = arith.constant dense<0.000000e+00> : vector<16xf32>
    %171 = vector.multi_reduction <add>, %166, %cst_55 [1] : vector<16x32xf32> to vector<16xf32>
    %172 = vector.shape_cast %171 : vector<16xf32> to vector<16x1xf32>
    %cst_56 = arith.constant 3.200000e+01 : f32
    %173 = vector.broadcast %cst_56 : f32 to vector<16x1xf32>
    %174 = arith.divf %172, %173 : vector<16x1xf32>
    %175 = vector.broadcast %174 : vector<16x1xf32> to vector<16x32xf32>
    %176 = arith.subf %166, %175 : vector<16x32xf32>
    %177 = arith.mulf %176, %176 : vector<16x32xf32>
    %cst_57 = arith.constant dense<0.000000e+00> : vector<16xf32>
    %178 = vector.multi_reduction <add>, %177, %cst_57 [1] : vector<16x32xf32> to vector<16xf32>
    %179 = vector.shape_cast %178 : vector<16xf32> to vector<16x1xf32>
    %cst_58 = arith.constant 3.200000e+01 : f32
    %180 = vector.broadcast %cst_58 : f32 to vector<16x1xf32>
    %181 = arith.divf %179, %180 : vector<16x1xf32>
    %182 = vector.broadcast %174 : vector<16x1xf32> to vector<16x32xf32>
    %183 = arith.subf %166, %182 : vector<16x32xf32>
    %cst_59 = arith.constant 9.99999974E-6 : f32
    %184 = vector.broadcast %cst_59 : f32 to vector<16x1xf32>
    %185 = arith.addf %181, %184 : vector<16x1xf32>
    %186 = math.rsqrt %185 : vector<16x1xf32>
    %187 = vector.broadcast %186 : vector<16x1xf32> to vector<16x32xf32>
    %188 = arith.mulf %183, %187 : vector<16x32xf32>
    %189 = vector.shape_cast %168 : vector<32xf32> to vector<1x32xf32>
    %190 = vector.broadcast %189 : vector<1x32xf32> to vector<16x32xf32>
    %191 = arith.mulf %188, %190 : vector<16x32xf32>
    %192 = vector.shape_cast %170 : vector<32xf32> to vector<1x32xf32>
    %193 = vector.broadcast %192 : vector<1x32xf32> to vector<16x32xf32>
    %194 = arith.addf %191, %193 : vector<16x32xf32>
    %195 = arith.addf %194, %23 : vector<16x32xf32>
    %c0_60 = arith.constant 0 : index
    %c0_61 = arith.constant 0 : index
    %196 = vector.load %arg10[%c0_60, %c0_61] : memref<32x32xbf16, #tpu.memory_space<vmem>>, vector<32x32xbf16>
    %197 = arith.truncf %195 : vector<16x32xf32> to vector<16x32xbf16>
    %cst_62 = arith.constant dense<0.000000e+00> : vector<16x32xf32>
    %198 = tpu.matmul %197, %196, %cst_62 {dimension_numbers = #tpu.dot_dimension_numbers<[1], [0], [0], [1], [0, 0, 1, 1], [], []>} : vector<16x32xbf16>, vector<32x32xbf16>, vector<16x32xf32> -> vector<16x32xf32>
    %c4 = arith.constant 4 : index
    %c0_63 = arith.constant 0 : index
    %199 = vector.load %arg16[%c4, %c0_63] : memref<16x32xf32, #tpu.memory_space<vmem>>, vector<1x32xf32>
    %200 = vector.shape_cast %199 : vector<1x32xf32> to vector<32xf32>
    %201 = vector.shape_cast %200 : vector<32xf32> to vector<1x32xf32>
    %202 = vector.broadcast %201 : vector<1x32xf32> to vector<16x32xf32>
    %203 = arith.addf %198, %202 : vector<16x32xf32>
    %204 = arith.addf %22, %24 : vector<24x32xf32>
    %c0_64 = arith.constant 0 : index
    %c0_65 = arith.constant 0 : index
    %205 = vector.load %arg11[%c0_64, %c0_65] : memref<32x32xbf16, #tpu.memory_space<vmem>>, vector<32x32xbf16>
    %206 = arith.truncf %204 : vector<24x32xf32> to vector<24x32xbf16>
    %cst_66 = arith.constant dense<0.000000e+00> : vector<24x32xf32>
    %207 = tpu.matmul %206, %205, %cst_66 {dimension_numbers = #tpu.dot_dimension_numbers<[1], [0], [0], [1], [0, 0, 1, 1], [], []>} : vector<24x32xbf16>, vector<32x32xbf16>, vector<24x32xf32> -> vector<24x32xf32>
    %c5 = arith.constant 5 : index
    %c0_67 = arith.constant 0 : index
    %208 = vector.load %arg16[%c5, %c0_67] : memref<16x32xf32, #tpu.memory_space<vmem>>, vector<1x32xf32>
    %209 = vector.shape_cast %208 : vector<1x32xf32> to vector<32xf32>
    %210 = vector.shape_cast %209 : vector<32xf32> to vector<1x32xf32>
    %211 = vector.broadcast %210 : vector<1x32xf32> to vector<24x32xf32>
    %212 = arith.addf %207, %211 : vector<24x32xf32>
    %c0_68 = arith.constant 0 : index
    %c0_69 = arith.constant 0 : index
    %213 = vector.load %arg12[%c0_68, %c0_69] : memref<32x32xbf16, #tpu.memory_space<vmem>>, vector<32x32xbf16>
    %214 = arith.truncf %22 : vector<24x32xf32> to vector<24x32xbf16>
    %cst_70 = arith.constant dense<0.000000e+00> : vector<24x32xf32>
    %215 = tpu.matmul %214, %213, %cst_70 {dimension_numbers = #tpu.dot_dimension_numbers<[1], [0], [0], [1], [0, 0, 1, 1], [], []>} : vector<24x32xbf16>, vector<32x32xbf16>, vector<24x32xf32> -> vector<24x32xf32>
    %c6 = arith.constant 6 : index
    %c0_71 = arith.constant 0 : index
    %216 = vector.load %arg16[%c6, %c0_71] : memref<16x32xf32, #tpu.memory_space<vmem>>, vector<1x32xf32>
    %217 = vector.shape_cast %216 : vector<1x32xf32> to vector<32xf32>
    %218 = vector.shape_cast %217 : vector<32xf32> to vector<1x32xf32>
    %219 = vector.broadcast %218 : vector<1x32xf32> to vector<24x32xf32>
    %220 = arith.addf %215, %219 : vector<24x32xf32>
    %c0_72 = arith.constant 0 : index
    %c0_73 = arith.constant 0 : index
    %221 = vector.load %arg13[%c0_72, %c0_73] : memref<32x32xbf16, #tpu.memory_space<vmem>>, vector<32x32xbf16>
    %c7 = arith.constant 7 : index
    %c0_74 = arith.constant 0 : index
    %222 = vector.load %arg16[%c7, %c0_74] : memref<16x32xf32, #tpu.memory_space<vmem>>, vector<1x32xf32>
    %223 = vector.shape_cast %222 : vector<1x32xf32> to vector<32xf32>
    %cst_75 = arith.constant 0.353553385 : f32
    %224 = vector.broadcast %cst_75 : f32 to vector<16x32xf32>
    %225 = arith.mulf %203, %224 : vector<16x32xf32>
    %cst_76 = arith.constant 0.000000e+00 : f32
    %226 = vector.broadcast %cst_76 : f32 to vector<16x32xf32>
    %cst_77 = arith.constant 0.000000e+00 : f32
    %227 = vector.shape_cast %5 : vector<1x32xi1> to vector<1x32xi1>
    %228 = vector.broadcast %227 : vector<1x32xi1> to vector<16x32xi1>
    %229 = vector.broadcast %cst_77 : f32 to vector<16x32xf32>
    %230 = arith.select %228, %225, %229 : vector<16x32xi1>, vector<16x32xf32>
    %231 = arith.truncf %230 : vector<16x32xf32> to vector<16x32xbf16>
    %232 = arith.truncf %212 : vector<24x32xf32> to vector<24x32xbf16>
    %cst_78 = arith.constant dense<0.000000e+00> : vector<16x24xf32>
    %233 = tpu.matmul %231, %232, %cst_78 {dimension_numbers = #tpu.dot_dimension_numbers<[1], [1], [0], [0], [0, 0, 1, 0], [], []>} : vector<16x32xbf16>, vector<24x32xbf16>, vector<16x24xf32> -> vector<16x24xf32>
    %234 = arith.addf %233, %26 : vector<16x24xf32>
    %cst_79 = arith.constant dense<0xFF800000> : vector<16xf32>
    %235 = vector.multi_reduction <maximumf>, %234, %cst_79 [1] : vector<16x24xf32> to vector<16xf32>
    %236 = vector.shape_cast %235 : vector<16xf32> to vector<16x1xf32>
    %237 = vector.broadcast %236 : vector<16x1xf32> to vector<16x24xf32>
    %238 = arith.subf %234, %237 : vector<16x24xf32>
    %239 = math.exp %238 : vector<16x24xf32>
    %cst_80 = arith.constant dense<0.000000e+00> : vector<16xf32>
    %240 = vector.multi_reduction <add>, %239, %cst_80 [1] : vector<16x24xf32> to vector<16xf32>
    %241 = vector.shape_cast %240 : vector<16xf32> to vector<16x1xf32>
    %242 = tpu.reciprocal %241 {approx = true} : vector<16x1xf32> -> vector<16x1xf32>
    %243 = vector.broadcast %242 : vector<16x1xf32> to vector<16x24xf32>
    %244 = arith.mulf %239, %243 : vector<16x24xf32>
    %cst_81 = arith.constant 0.000000e+00 : f32
    %245 = vector.shape_cast %5 : vector<1x32xi1> to vector<1x32xi1>
    %246 = vector.broadcast %245 : vector<1x32xi1> to vector<24x32xi1>
    %247 = vector.broadcast %cst_81 : f32 to vector<24x32xf32>
    %248 = arith.select %246, %220, %247 : vector<24x32xi1>, vector<24x32xf32>
    %249 = arith.truncf %244 : vector<16x24xf32> to vector<16x24xbf16>
    %250 = arith.truncf %248 : vector<24x32xf32> to vector<24x32xbf16>
    %cst_82 = arith.constant dense<0.000000e+00> : vector<16x32xf32>
    %251 = tpu.matmul %249, %250, %cst_82 {dimension_numbers = #tpu.dot_dimension_numbers<[1], [0], [0], [1], [0, 0, 1, 1], [], []>} : vector<16x24xbf16>, vector<24x32xbf16>, vector<16x32xf32> -> vector<16x32xf32>
    %252 = arith.addf %226, %251 : vector<16x32xf32>
    %cst_83 = arith.constant 0.000000e+00 : f32
    %253 = vector.shape_cast %10 : vector<1x32xi1> to vector<1x32xi1>
    %254 = vector.broadcast %253 : vector<1x32xi1> to vector<16x32xi1>
    %255 = vector.broadcast %cst_83 : f32 to vector<16x32xf32>
    %256 = arith.select %254, %225, %255 : vector<16x32xi1>, vector<16x32xf32>
    %257 = arith.truncf %256 : vector<16x32xf32> to vector<16x32xbf16>
    %258 = arith.truncf %212 : vector<24x32xf32> to vector<24x32xbf16>
    %cst_84 = arith.constant dense<0.000000e+00> : vector<16x24xf32>
    %259 = tpu.matmul %257, %258, %cst_84 {dimension_numbers = #tpu.dot_dimension_numbers<[1], [1], [0], [0], [0, 0, 1, 0], [], []>} : vector<16x32xbf16>, vector<24x32xbf16>, vector<16x24xf32> -> vector<16x24xf32>
    %260 = arith.addf %259, %26 : vector<16x24xf32>
    %cst_85 = arith.constant dense<0xFF800000> : vector<16xf32>
    %261 = vector.multi_reduction <maximumf>, %260, %cst_85 [1] : vector<16x24xf32> to vector<16xf32>
    %262 = vector.shape_cast %261 : vector<16xf32> to vector<16x1xf32>
    %263 = vector.broadcast %262 : vector<16x1xf32> to vector<16x24xf32>
    %264 = arith.subf %260, %263 : vector<16x24xf32>
    %265 = math.exp %264 : vector<16x24xf32>
    %cst_86 = arith.constant dense<0.000000e+00> : vector<16xf32>
    %266 = vector.multi_reduction <add>, %265, %cst_86 [1] : vector<16x24xf32> to vector<16xf32>
    %267 = vector.shape_cast %266 : vector<16xf32> to vector<16x1xf32>
    %268 = tpu.reciprocal %267 {approx = true} : vector<16x1xf32> -> vector<16x1xf32>
    %269 = vector.broadcast %268 : vector<16x1xf32> to vector<16x24xf32>
    %270 = arith.mulf %265, %269 : vector<16x24xf32>
    %cst_87 = arith.constant 0.000000e+00 : f32
    %271 = vector.shape_cast %10 : vector<1x32xi1> to vector<1x32xi1>
    %272 = vector.broadcast %271 : vector<1x32xi1> to vector<24x32xi1>
    %273 = vector.broadcast %cst_87 : f32 to vector<24x32xf32>
    %274 = arith.select %272, %220, %273 : vector<24x32xi1>, vector<24x32xf32>
    %275 = arith.truncf %270 : vector<16x24xf32> to vector<16x24xbf16>
    %276 = arith.truncf %274 : vector<24x32xf32> to vector<24x32xbf16>
    %cst_88 = arith.constant dense<0.000000e+00> : vector<16x32xf32>
    %277 = tpu.matmul %275, %276, %cst_88 {dimension_numbers = #tpu.dot_dimension_numbers<[1], [0], [0], [1], [0, 0, 1, 1], [], []>} : vector<16x24xbf16>, vector<24x32xbf16>, vector<16x32xf32> -> vector<16x32xf32>
    %278 = arith.addf %252, %277 : vector<16x32xf32>
    %cst_89 = arith.constant 0.000000e+00 : f32
    %279 = vector.shape_cast %15 : vector<1x32xi1> to vector<1x32xi1>
    %280 = vector.broadcast %279 : vector<1x32xi1> to vector<16x32xi1>
    %281 = vector.broadcast %cst_89 : f32 to vector<16x32xf32>
    %282 = arith.select %280, %225, %281 : vector<16x32xi1>, vector<16x32xf32>
    %283 = arith.truncf %282 : vector<16x32xf32> to vector<16x32xbf16>
    %284 = arith.truncf %212 : vector<24x32xf32> to vector<24x32xbf16>
    %cst_90 = arith.constant dense<0.000000e+00> : vector<16x24xf32>
    %285 = tpu.matmul %283, %284, %cst_90 {dimension_numbers = #tpu.dot_dimension_numbers<[1], [1], [0], [0], [0, 0, 1, 0], [], []>} : vector<16x32xbf16>, vector<24x32xbf16>, vector<16x24xf32> -> vector<16x24xf32>
    %286 = arith.addf %285, %26 : vector<16x24xf32>
    %cst_91 = arith.constant dense<0xFF800000> : vector<16xf32>
    %287 = vector.multi_reduction <maximumf>, %286, %cst_91 [1] : vector<16x24xf32> to vector<16xf32>
    %288 = vector.shape_cast %287 : vector<16xf32> to vector<16x1xf32>
    %289 = vector.broadcast %288 : vector<16x1xf32> to vector<16x24xf32>
    %290 = arith.subf %286, %289 : vector<16x24xf32>
    %291 = math.exp %290 : vector<16x24xf32>
    %cst_92 = arith.constant dense<0.000000e+00> : vector<16xf32>
    %292 = vector.multi_reduction <add>, %291, %cst_92 [1] : vector<16x24xf32> to vector<16xf32>
    %293 = vector.shape_cast %292 : vector<16xf32> to vector<16x1xf32>
    %294 = tpu.reciprocal %293 {approx = true} : vector<16x1xf32> -> vector<16x1xf32>
    %295 = vector.broadcast %294 : vector<16x1xf32> to vector<16x24xf32>
    %296 = arith.mulf %291, %295 : vector<16x24xf32>
    %cst_93 = arith.constant 0.000000e+00 : f32
    %297 = vector.shape_cast %15 : vector<1x32xi1> to vector<1x32xi1>
    %298 = vector.broadcast %297 : vector<1x32xi1> to vector<24x32xi1>
    %299 = vector.broadcast %cst_93 : f32 to vector<24x32xf32>
    %300 = arith.select %298, %220, %299 : vector<24x32xi1>, vector<24x32xf32>
    %301 = arith.truncf %296 : vector<16x24xf32> to vector<16x24xbf16>
    %302 = arith.truncf %300 : vector<24x32xf32> to vector<24x32xbf16>
    %cst_94 = arith.constant dense<0.000000e+00> : vector<16x32xf32>
    %303 = tpu.matmul %301, %302, %cst_94 {dimension_numbers = #tpu.dot_dimension_numbers<[1], [0], [0], [1], [0, 0, 1, 1], [], []>} : vector<16x24xbf16>, vector<24x32xbf16>, vector<16x32xf32> -> vector<16x32xf32>
    %304 = arith.addf %278, %303 : vector<16x32xf32>
    %cst_95 = arith.constant 0.000000e+00 : f32
    %305 = vector.shape_cast %20 : vector<1x32xi1> to vector<1x32xi1>
    %306 = vector.broadcast %305 : vector<1x32xi1> to vector<16x32xi1>
    %307 = vector.broadcast %cst_95 : f32 to vector<16x32xf32>
    %308 = arith.select %306, %225, %307 : vector<16x32xi1>, vector<16x32xf32>
    %309 = arith.truncf %308 : vector<16x32xf32> to vector<16x32xbf16>
    %310 = arith.truncf %212 : vector<24x32xf32> to vector<24x32xbf16>
    %cst_96 = arith.constant dense<0.000000e+00> : vector<16x24xf32>
    %311 = tpu.matmul %309, %310, %cst_96 {dimension_numbers = #tpu.dot_dimension_numbers<[1], [1], [0], [0], [0, 0, 1, 0], [], []>} : vector<16x32xbf16>, vector<24x32xbf16>, vector<16x24xf32> -> vector<16x24xf32>
    %312 = arith.addf %311, %26 : vector<16x24xf32>
    %cst_97 = arith.constant dense<0xFF800000> : vector<16xf32>
    %313 = vector.multi_reduction <maximumf>, %312, %cst_97 [1] : vector<16x24xf32> to vector<16xf32>
    %314 = vector.shape_cast %313 : vector<16xf32> to vector<16x1xf32>
    %315 = vector.broadcast %314 : vector<16x1xf32> to vector<16x24xf32>
    %316 = arith.subf %312, %315 : vector<16x24xf32>
    %317 = math.exp %316 : vector<16x24xf32>
    %cst_98 = arith.constant dense<0.000000e+00> : vector<16xf32>
    %318 = vector.multi_reduction <add>, %317, %cst_98 [1] : vector<16x24xf32> to vector<16xf32>
    %319 = vector.shape_cast %318 : vector<16xf32> to vector<16x1xf32>
    %320 = tpu.reciprocal %319 {approx = true} : vector<16x1xf32> -> vector<16x1xf32>
    %321 = vector.broadcast %320 : vector<16x1xf32> to vector<16x24xf32>
    %322 = arith.mulf %317, %321 : vector<16x24xf32>
    %cst_99 = arith.constant 0.000000e+00 : f32
    %323 = vector.shape_cast %20 : vector<1x32xi1> to vector<1x32xi1>
    %324 = vector.broadcast %323 : vector<1x32xi1> to vector<24x32xi1>
    %325 = vector.broadcast %cst_99 : f32 to vector<24x32xf32>
    %326 = arith.select %324, %220, %325 : vector<24x32xi1>, vector<24x32xf32>
    %327 = arith.truncf %322 : vector<16x24xf32> to vector<16x24xbf16>
    %328 = arith.truncf %326 : vector<24x32xf32> to vector<24x32xbf16>
    %cst_100 = arith.constant dense<0.000000e+00> : vector<16x32xf32>
    %329 = tpu.matmul %327, %328, %cst_100 {dimension_numbers = #tpu.dot_dimension_numbers<[1], [0], [0], [1], [0, 0, 1, 1], [], []>} : vector<16x24xbf16>, vector<24x32xbf16>, vector<16x32xf32> -> vector<16x32xf32>
    %330 = arith.addf %304, %329 : vector<16x32xf32>
    %331 = arith.truncf %330 : vector<16x32xf32> to vector<16x32xbf16>
    %cst_101 = arith.constant dense<0.000000e+00> : vector<16x32xf32>
    %332 = tpu.matmul %331, %221, %cst_101 {dimension_numbers = #tpu.dot_dimension_numbers<[1], [0], [0], [1], [0, 0, 1, 1], [], []>} : vector<16x32xbf16>, vector<32x32xbf16>, vector<16x32xf32> -> vector<16x32xf32>
    %333 = vector.shape_cast %223 : vector<32xf32> to vector<1x32xf32>
    %334 = vector.broadcast %333 : vector<1x32xf32> to vector<16x32xf32>
    %335 = arith.addf %332, %334 : vector<16x32xf32>
    %336 = arith.addf %194, %335 : vector<16x32xf32>
    %c10 = arith.constant 10 : index
    %c0_102 = arith.constant 0 : index
    %337 = vector.load %arg16[%c10, %c0_102] : memref<16x32xf32, #tpu.memory_space<vmem>>, vector<1x32xf32>
    %338 = vector.shape_cast %337 : vector<1x32xf32> to vector<32xf32>
    %c11 = arith.constant 11 : index
    %c0_103 = arith.constant 0 : index
    %339 = vector.load %arg16[%c11, %c0_103] : memref<16x32xf32, #tpu.memory_space<vmem>>, vector<1x32xf32>
    %340 = vector.shape_cast %339 : vector<1x32xf32> to vector<32xf32>
    %cst_104 = arith.constant dense<0.000000e+00> : vector<16xf32>
    %341 = vector.multi_reduction <add>, %336, %cst_104 [1] : vector<16x32xf32> to vector<16xf32>
    %342 = vector.shape_cast %341 : vector<16xf32> to vector<16x1xf32>
    %cst_105 = arith.constant 3.200000e+01 : f32
    %343 = vector.broadcast %cst_105 : f32 to vector<16x1xf32>
    %344 = arith.divf %342, %343 : vector<16x1xf32>
    %345 = vector.broadcast %344 : vector<16x1xf32> to vector<16x32xf32>
    %346 = arith.subf %336, %345 : vector<16x32xf32>
    %347 = arith.mulf %346, %346 : vector<16x32xf32>
    %cst_106 = arith.constant dense<0.000000e+00> : vector<16xf32>
    %348 = vector.multi_reduction <add>, %347, %cst_106 [1] : vector<16x32xf32> to vector<16xf32>
    %349 = vector.shape_cast %348 : vector<16xf32> to vector<16x1xf32>
    %cst_107 = arith.constant 3.200000e+01 : f32
    %350 = vector.broadcast %cst_107 : f32 to vector<16x1xf32>
    %351 = arith.divf %349, %350 : vector<16x1xf32>
    %352 = vector.broadcast %344 : vector<16x1xf32> to vector<16x32xf32>
    %353 = arith.subf %336, %352 : vector<16x32xf32>
    %cst_108 = arith.constant 9.99999974E-6 : f32
    %354 = vector.broadcast %cst_108 : f32 to vector<16x1xf32>
    %355 = arith.addf %351, %354 : vector<16x1xf32>
    %356 = math.rsqrt %355 : vector<16x1xf32>
    %357 = vector.broadcast %356 : vector<16x1xf32> to vector<16x32xf32>
    %358 = arith.mulf %353, %357 : vector<16x32xf32>
    %359 = vector.shape_cast %338 : vector<32xf32> to vector<1x32xf32>
    %360 = vector.broadcast %359 : vector<1x32xf32> to vector<16x32xf32>
    %361 = arith.mulf %358, %360 : vector<16x32xf32>
    %362 = vector.shape_cast %340 : vector<32xf32> to vector<1x32xf32>
    %363 = vector.broadcast %362 : vector<1x32xf32> to vector<16x32xf32>
    %364 = arith.addf %361, %363 : vector<16x32xf32>
    %c0_109 = arith.constant 0 : index
    %c0_110 = arith.constant 0 : index
    %365 = vector.load %arg14[%c0_109, %c0_110] : memref<32x64xbf16, #tpu.memory_space<vmem>>, vector<32x64xbf16>
    %366 = arith.truncf %364 : vector<16x32xf32> to vector<16x32xbf16>
    %cst_111 = arith.constant dense<0.000000e+00> : vector<16x64xf32>
    %367 = tpu.matmul %366, %365, %cst_111 {dimension_numbers = #tpu.dot_dimension_numbers<[1], [0], [0], [1], [0, 0, 1, 1], [], []>} : vector<16x32xbf16>, vector<32x64xbf16>, vector<16x64xf32> -> vector<16x64xf32>
    %c0_112 = arith.constant 0 : index
    %c0_113 = arith.constant 0 : index
    %368 = vector.load %arg17[%c0_112, %c0_113] : memref<1x64xf32, #tpu.memory_space<vmem>>, vector<1x64xf32>
    %369 = vector.shape_cast %368 : vector<1x64xf32> to vector<64xf32>
    %370 = vector.shape_cast %369 : vector<64xf32> to vector<1x64xf32>
    %371 = vector.broadcast %370 : vector<1x64xf32> to vector<16x64xf32>
    %372 = arith.addf %367, %371 : vector<16x64xf32>
    %cst_114 = arith.constant 0.000000e+00 : f32
    %373 = vector.broadcast %cst_114 : f32 to vector<16x64xf32>
    %374 = arith.maximumf %372, %373 : vector<16x64xf32>
    %c0_115 = arith.constant 0 : index
    %c0_116 = arith.constant 0 : index
    %375 = vector.load %arg15[%c0_115, %c0_116] : memref<64x32xbf16, #tpu.memory_space<vmem>>, vector<64x32xbf16>
    %376 = arith.truncf %374 : vector<16x64xf32> to vector<16x64xbf16>
    %cst_117 = arith.constant dense<0.000000e+00> : vector<16x32xf32>
    %377 = tpu.matmul %376, %375, %cst_117 {dimension_numbers = #tpu.dot_dimension_numbers<[1], [0], [0], [1], [0, 0, 1, 1], [], []>} : vector<16x64xbf16>, vector<64x32xbf16>, vector<16x32xf32> -> vector<16x32xf32>
    %c14 = arith.constant 14 : index
    %c0_118 = arith.constant 0 : index
    %378 = vector.load %arg16[%c14, %c0_118] : memref<16x32xf32, #tpu.memory_space<vmem>>, vector<1x32xf32>
    %379 = vector.shape_cast %378 : vector<1x32xf32> to vector<32xf32>
    %380 = vector.shape_cast %379 : vector<32xf32> to vector<1x32xf32>
    %381 = vector.broadcast %380 : vector<1x32xf32> to vector<16x32xf32>
    %382 = arith.addf %377, %381 : vector<16x32xf32>
    %383 = arith.addf %364, %382 : vector<16x32xf32>
    %c12 = arith.constant 12 : index
    %c0_119 = arith.constant 0 : index
    %384 = vector.load %arg16[%c12, %c0_119] : memref<16x32xf32, #tpu.memory_space<vmem>>, vector<1x32xf32>
    %385 = vector.shape_cast %384 : vector<1x32xf32> to vector<32xf32>
    %c13 = arith.constant 13 : index
    %c0_120 = arith.constant 0 : index
    %386 = vector.load %arg16[%c13, %c0_120] : memref<16x32xf32, #tpu.memory_space<vmem>>, vector<1x32xf32>
    %387 = vector.shape_cast %386 : vector<1x32xf32> to vector<32xf32>
    %cst_121 = arith.constant dense<0.000000e+00> : vector<16xf32>
    %388 = vector.multi_reduction <add>, %383, %cst_121 [1] : vector<16x32xf32> to vector<16xf32>
    %389 = vector.shape_cast %388 : vector<16xf32> to vector<16x1xf32>
    %cst_122 = arith.constant 3.200000e+01 : f32
    %390 = vector.broadcast %cst_122 : f32 to vector<16x1xf32>
    %391 = arith.divf %389, %390 : vector<16x1xf32>
    %392 = vector.broadcast %391 : vector<16x1xf32> to vector<16x32xf32>
    %393 = arith.subf %383, %392 : vector<16x32xf32>
    %394 = arith.mulf %393, %393 : vector<16x32xf32>
    %cst_123 = arith.constant dense<0.000000e+00> : vector<16xf32>
    %395 = vector.multi_reduction <add>, %394, %cst_123 [1] : vector<16x32xf32> to vector<16xf32>
    %396 = vector.shape_cast %395 : vector<16xf32> to vector<16x1xf32>
    %cst_124 = arith.constant 3.200000e+01 : f32
    %397 = vector.broadcast %cst_124 : f32 to vector<16x1xf32>
    %398 = arith.divf %396, %397 : vector<16x1xf32>
    %399 = vector.broadcast %391 : vector<16x1xf32> to vector<16x32xf32>
    %400 = arith.subf %383, %399 : vector<16x32xf32>
    %cst_125 = arith.constant 9.99999974E-6 : f32
    %401 = vector.broadcast %cst_125 : f32 to vector<16x1xf32>
    %402 = arith.addf %398, %401 : vector<16x1xf32>
    %403 = math.rsqrt %402 : vector<16x1xf32>
    %404 = vector.broadcast %403 : vector<16x1xf32> to vector<16x32xf32>
    %405 = arith.mulf %400, %404 : vector<16x32xf32>
    %406 = vector.shape_cast %385 : vector<32xf32> to vector<1x32xf32>
    %407 = vector.broadcast %406 : vector<1x32xf32> to vector<16x32xf32>
    %408 = arith.mulf %405, %407 : vector<16x32xf32>
    %409 = vector.shape_cast %387 : vector<32xf32> to vector<1x32xf32>
    %410 = vector.broadcast %409 : vector<1x32xf32> to vector<16x32xf32>
    %411 = arith.addf %408, %410 : vector<16x32xf32>
    %c0_126 = arith.constant 0 : index
    %c0_127 = arith.constant 0 : index
    %412 = vector.load %arg18[%c0_126, %c0_127] : memref<16x32xf32, #tpu.memory_space<vmem>>, vector<16x32xf32>
    tpu.vector_store %arg18[%c0_126, %c0_127], %411 {strides = array<i32>} : memref<16x32xf32, #tpu.memory_space<vmem>>, vector<16x32xf32>,
    return
  }
  func.func @transform_0(%arg0: i32) -> (i32, i32) {
    %c0_i32 = arith.constant 0 : i32
    %c0_i32_0 = arith.constant 0 : i32
    %c0_i32_1 = arith.constant 0 : i32
    return %c0_i32, %c0_i32_0 : i32, i32
  }
  func.func @transform_1(%arg0: i32) -> (i32, i32) {
    %c0_i32 = arith.constant 0 : i32
    %c0_i32_0 = arith.constant 0 : i32
    %c0_i32_1 = arith.constant 0 : i32
    return %c0_i32, %c0_i32_0 : i32, i32
  }
  func.func @transform_2(%arg0: i32) -> (i32, i32) {
    %c0_i32 = arith.constant 0 : i32
    %c0_i32_0 = arith.constant 0 : i32
    %c0_i32_1 = arith.constant 0 : i32
    return %c0_i32, %c0_i32_0 : i32, i32
  }
  func.func @transform_3(%arg0: i32) -> (i32, i32) {
    %c0_i32 = arith.constant 0 : i32
    %c0_i32_0 = arith.constant 0 : i32
    %c0_i32_1 = arith.constant 0 : i32
    return %c0_i32, %c0_i32_0 : i32, i32
  }
  func.func @transform_4(%arg0: i32) -> (i32, i32) {
    %c0_i32 = arith.constant 0 : i32
    %c0_i32_0 = arith.constant 0 : i32
    %c0_i32_1 = arith.constant 0 : i32
    return %c0_i32, %c0_i32_0 : i32, i32
  }
  func.func @transform_5(%arg0: i32) -> (i32, i32) {
    %c0_i32 = arith.constant 0 : i32
    %c0_i32_0 = arith.constant 0 : i32
    %c0_i32_1 = arith.constant 0 : i32
    return %c0_i32, %c0_i32_0 : i32, i32
  }
  func.func @transform_6(%arg0: i32) -> (i32, i32) {
    %c0_i32 = arith.constant 0 : i32
    %c0_i32_0 = arith.constant 0 : i32
    %c0_i32_1 = arith.constant 0 : i32
    return %c0_i32, %c0_i32_0 : i32, i32
  }
  func.func @transform_7(%arg0: i32) -> (i32, i32) {
    %c0_i32 = arith.constant 0 : i32
    %c0_i32_0 = arith.constant 0 : i32
    %c0_i32_1 = arith.constant 0 : i32
    return %c0_i32, %c0_i32_0 : i32, i32
  }
  func.func @transform_8(%arg0: i32) -> (i32, i32) {
    %c0_i32 = arith.constant 0 : i32
    %c0_i32_0 = arith.constant 0 : i32
    %c0_i32_1 = arith.constant 0 : i32
    return %c0_i32, %c0_i32_0 : i32, i32
  }
  func.func @transform_9(%arg0: i32) -> (i32, i32) {
    %c0_i32 = arith.constant 0 : i32
    %c0_i32_0 = arith.constant 0 : i32
    %c0_i32_1 = arith.constant 0 : i32
    return %c0_i32, %c0_i32_0 : i32, i32
  }
  func.func @transform_10(%arg0: i32) -> (i32, i32) {
    %c0_i32 = arith.constant 0 : i32
    %c0_i32_0 = arith.constant 0 : i32
    %c0_i32_1 = arith.constant 0 : i32
    return %c0_i32, %c0_i32_0 : i32, i32
  }
  func.func @transform_11(%arg0: i32) -> (i32, i32) {
    %c0_i32 = arith.constant 0 : i32
    %c0_i32_0 = arith.constant 0 : i32
    %c0_i32_1 = arith.constant 0 : i32
    return %c0_i32, %c0_i32_0 : i32, i32
  }
  func.func @transform_12(%arg0: i32) -> (i32, i32) {
    %c0_i32 = arith.constant 0 : i32
    %c0_i32_0 = arith.constant 0 : i32
    %c0_i32_1 = arith.constant 0 : i32
    return %c0_i32, %c0_i32_0 : i32, i32
  }
  func.func @transform_13(%arg0: i32) -> (i32, i32) {
    %c0_i32 = arith.constant 0 : i32
    %c0_i32_0 = arith.constant 0 : i32
    %c0_i32_1 = arith.constant 0 : i32
    return %c0_i32, %c0_i32_0 : i32, i32
  }
  func.func @transform_14(%arg0: i32) -> (i32, i32) {
    %c0_i32 = arith.constant 0 : i32
    %c0_i32_0 = arith.constant 0 : i32
    %c0_i32_1 = arith.constant 0 : i32
    return %c0_i32, %c0_i32_0 : i32, i32
  }
  func.func @transform_15(%arg0: i32) -> (i32, i32) {
    %c0_i32 = arith.constant 0 : i32
    %c0_i32_0 = arith.constant 0 : i32
    %c0_i32_1 = arith.constant 0 : i32
    return %c0_i32, %c0_i32_0 : i32, i32
  }
  func.func @transform_16(%arg0: i32) -> (i32, i32) {
    %c0_i32 = arith.constant 0 : i32
    %c0_i32_0 = arith.constant 0 : i32
    %c0_i32_1 = arith.constant 0 : i32
    return %c0_i32, %c0_i32_0 : i32, i32
  }
  func.func @transform_17(%arg0: i32) -> (i32, i32) {
    %c0_i32 = arith.constant 0 : i32
    %c0_i32_0 = arith.constant 0 : i32
    %c0_i32_1 = arith.constant 0 : i32
    return %c0_i32, %c0_i32_0 : i32, i32
  }
}

</mosaic_0001>

<llo_original>
// kernel: tpu_custom_call.1
$region0: #{tpu_custom_call.1}
  #allocation0 [shape = 'u32[]', space=smem, size = 0x4, offset = 0x4, fixed_abs, tag = 'smem constant byte address 0x4 - core index']
  #allocation1 [shape = 'u32[72,128]{1,0:T(1,128)}', space=vmem, size = 0x9000, scoped, tag = 'internal scratch']
  %s0 = inlined_call_operand.hbm [shape: f32[16,32], index: 0, kind: input, shape index: {}]
  %s1 = inlined_call_operand.vmem [shape: f32[24,32], index: 1, kind: input, shape index: {}]
  %s2 = inlined_call_operand.hbm [shape: f32[16,32], index: 2, kind: input, shape index: {}]
  %s3 = inlined_call_operand.vmem [shape: f32[24,32], index: 3, kind: input, shape index: {}]
  %s4 = inlined_call_operand.hbm [shape: f32[16,16], index: 4, kind: input, shape index: {}]
  %s5 = inlined_call_operand.hbm [shape: f32[16,24], index: 5, kind: input, shape index: {}]
  %s6 = inlined_call_operand.hbm [shape: bf16[32,64], index: 6, kind: input, shape index: {}]
  %s7 = inlined_call_operand.hbm [shape: bf16[32,32], index: 7, kind: input, shape index: {}]
  %s8 = inlined_call_operand.hbm [shape: bf16[32,32], index: 8, kind: input, shape index: {}]
  %s9 = inlined_call_operand.hbm [shape: bf16[32,32], index: 9, kind: input, shape index: {}]
  %s10 = inlined_call_operand.hbm [shape: bf16[32,32], index: 10, kind: input, shape index: {}]
  %s11 = inlined_call_operand.hbm [shape: bf16[32,32], index: 11, kind: input, shape index: {}]
  %s12 = inlined_call_operand.hbm [shape: bf16[32,32], index: 12, kind: input, shape index: {}]
  %s13 = inlined_call_operand.hbm [shape: bf16[32,64], index: 13, kind: input, shape index: {}]
  %s14 = inlined_call_operand.vmem [shape: bf16[64,32], index: 14, kind: input, shape index: {}]
  %s15 = inlined_call_operand.hbm [shape: f32[16,32], index: 15, kind: input, shape index: {}]
  %s16 = inlined_call_operand.vmem [shape: f32[1,64], index: 16, kind: input, shape index: {}]
  %s17 = inlined_call_operand.hbm [shape: f32[16,32], index: 17, kind: output, shape index: {}]
  %s18 = sld [smem:[#allocation0]]
  $region130: #{tpu_custom_call.1} parent=0
    _
  %s20 = ssub.s32 1, %s18
  %s21 = scalar_select 0, %s20, %s18
  $region1: #{tpu_custom_call.1} parent=0
    #allocation2 [shape = 'u8[8192]{0}', space=vmem, size = 0x2000, scoped, tag = 'input window, operand 0, single buffered']
    #allocation3 [shape = 's32[1]{0}', space=sflag, size = 0x4, scoped, tag = 'scoped memory for tpu_custom_call.1']
    #allocation4 [shape = 's32[1]{0}', space=sflag, size = 0x4, scoped, tag = 'scoped memory for tpu_custom_call.1']
    #allocation5 [shape = 'u8[8192]{0}', space=vmem, size = 0x2000, scoped, tag = 'input window, operand 2, single buffered']
    #allocation6 [shape = 's32[1]{0}', space=sflag, size = 0x4, scoped, tag = 'scoped memory for tpu_custom_call.1']
    #allocation7 [shape = 'u8[8192]{0}', space=vmem, size = 0x2000, scoped, tag = 'input window, operand 4, single buffered']
    #allocation8 [shape = 'u8[8192]{0}', space=vmem, size = 0x2000, scoped, tag = 'input window, operand 5, single buffered']
    #allocation9 [shape = 's32[1]{0}', space=sflag, size = 0x4, scoped, tag = 'scoped memory for tpu_custom_call.1']
    #allocation10 [shape = 'u8[8192]{0}', space=vmem, size = 0x2000, scoped, tag = 'input window, operand 6, single buffered']
    #allocation11 [shape = 'u8[8192]{0}', space=vmem, size = 0x2000, scoped, tag = 'input window, operand 7, single buffered']
    #allocation12 [shape = 's32[1]{0}', space=sflag, size = 0x4, scoped, tag = 'scoped memory for tpu_custom_call.1']
    #allocation13 [shape = 'u8[8192]{0}', space=vmem, size = 0x2000, scoped, tag = 'input window, operand 8, single buffered']
    #allocation14 [shape = 'u8[8192]{0}', space=vmem, size = 0x2000, scoped, tag = 'input window, operand 9, single buffered']
    #allocation15 [shape = 's32[1]{0}', space=sflag, size = 0x4, scoped, tag = 'scoped memory for tpu_custom_call.1']
    #allocation16 [shape = 'u8[8192]{0}', space=vmem, size = 0x2000, scoped, tag = 'input window, operand 10, single buffered']
    #allocation17 [shape = 'u8[8192]{0}', space=vmem, size = 0x2000, scoped, tag = 'input window, operand 11, single buffered']
    #allocation18 [shape = 's32[1]{0}', space=sflag, size = 0x4, scoped, tag = 'scoped memory for tpu_custom_call.1']
    #allocation19 [shape = 'u8[8192]{0}', space=vmem, size = 0x2000, scoped, tag = 'input window, operand 12, single buffered']
    #allocation20 [shape = 'u8[8192]{0}', space=vmem, size = 0x2000, scoped, tag = 'input window, operand 13, single buffered']
    #allocation21 [shape = 's32[1]{0}', space=sflag, size = 0x4, scoped, tag = 'scoped memory for tpu_custom_call.1']
    #allocation22 [shape = 'u8[8192]{0}', space=vmem, size = 0x2000, scoped, tag = 'input window, operand 15, single buffered']
    #allocation23 [shape = 'u8[8192]{0}', space=vmem, size = 0x2000, scoped, tag = 'output window, operand 0, single buffered']
    %22 = vsyncpa [#allocation3], 0
    %23 = vsyncpa [#allocation6], 0
    %24 = vsyncpa [#allocation9], 0
    %25 = vsyncpa [#allocation12], 0
    %26 = vsyncpa [#allocation15], 0
    %27 = vsyncpa [#allocation18], 0
    %28 = vsyncpa [#allocation21], 0
    %29 = vsyncpa [#allocation4], 0
    // Predicated region
    $region2: #{tpu_custom_call.1} parent=1 // pred_check
      _
    $region3: #{tpu_custom_call.1} parent=1 // pred_check_branch
      %31 = sbr.rel (0) target = $region5
    $region4: #{tpu_custom_call.1} parent=1 // pred_region
      %33 = vsyncadd [#allocation3], 0
      %s34 = sshll.u32 %s0, 4
      %s35 = int_to_ptr.hbm [resolvable:$true] %s34
      %s36 = sshll.u32 [#allocation2], 4
      %s37 = int_to_ptr.vmem [resolvable:$true] %s36
      %42 = dma.hbm_to_vmem [thread:$0]  %s35, 256, %s37, [#allocation3], 128, 128, 8
    $region5: #{tpu_custom_call.1} parent=1 // pred_fallthru
      _
    // Predicated region
    $region6: #{tpu_custom_call.1} parent=1 // pred_check
      _
    $region7: #{tpu_custom_call.1} parent=1 // pred_check_branch
      %44 = sbr.rel (0) target = $region9
    $region8: #{tpu_custom_call.1} parent=1 // pred_region
      _
    $region9: #{tpu_custom_call.1} parent=1 // pred_fallthru
      _
    // Predicated region
    $region10: #{tpu_custom_call.1} parent=1 // pred_check
      _
    $region11: #{tpu_custom_call.1} parent=1 // pred_check_branch
      %46 = sbr.rel (0) target = $region13
    $region12: #{tpu_custom_call.1} parent=1 // pred_region
      %48 = vsyncadd [#allocation6], 0
      %s49 = sshll.u32 %s2, 4
      %s50 = int_to_ptr.hbm [resolvable:$true] %s49
      %s51 = sshll.u32 [#allocation5], 4
      %s52 = int_to_ptr.vmem [resolvable:$true] %s51
      %57 = dma.hbm_to_vmem [thread:$0]  %s50, 256, %s52, [#allocation6], 128, 128, 8
    $region13: #{tpu_custom_call.1} parent=1 // pred_fallthru
      _
    // Predicated region
    $region14: #{tpu_custom_call.1} parent=1 // pred_check
      _
    $region15: #{tpu_custom_call.1} parent=1 // pred_check_branch
      %59 = sbr.rel (0) target = $region17
    $region16: #{tpu_custom_call.1} parent=1 // pred_region
      _
    $region17: #{tpu_custom_call.1} parent=1 // pred_fallthru
      _
    // Predicated region
    $region18: #{tpu_custom_call.1} parent=1 // pred_check
      _
    $region19: #{tpu_custom_call.1} parent=1 // pred_check_branch
      %61 = sbr.rel (0) target = $region21
    $region20: #{tpu_custom_call.1} parent=1 // pred_region
      %63 = vsyncadd [#allocation6], 0
      %s64 = sshll.u32 %s4, 4
      %s65 = int_to_ptr.hbm [resolvable:$true] %s64
      %s66 = sshll.u32 [#allocation7], 4
      %s67 = int_to_ptr.vmem [resolvable:$true] %s66
      %72 = dma.hbm_to_vmem [thread:$0]  %s65, 256, %s67, [#allocation6], 128, 128, 8
    $region21: #{tpu_custom_call.1} parent=1 // pred_fallthru
      _
    // Predicated region
    $region22: #{tpu_custom_call.1} parent=1 // pred_check
      _
    $region23: #{tpu_custom_call.1} parent=1 // pred_check_branch
      %74 = sbr.rel (0) target = $region25
    $region24: #{tpu_custom_call.1} parent=1 // pred_region
      %76 = vsyncadd [#allocation9], 0
      %s77 = sshll.u32 %s5, 4
      %s78 = int_to_ptr.hbm [resolvable:$true] %s77
      %s79 = sshll.u32 [#allocation8], 4
      %s80 = int_to_ptr.vmem [resolvable:$true] %s79
      %85 = dma.hbm_to_vmem [thread:$0]  %s78, 256, %s80, [#allocation9], 128, 128, 8
    $region25: #{tpu_custom_call.1} parent=1 // pred_fallthru
      _
    // Predicated region
    $region26: #{tpu_custom_call.1} parent=1 // pred_check
      _
    $region27: #{tpu_custom_call.1} parent=1 // pred_check_branch
      %87 = sbr.rel (0) target = $region29
    $region28: #{tpu_custom_call.1} parent=1 // pred_region
      %89 = vsyncadd [#allocation9], 0
      %s90 = sshll.u32 %s6, 4
      %s91 = int_to_ptr.hbm [resolvable:$true] %s90
      %s92 = sshll.u32 [#allocation10], 4
      %s93 = int_to_ptr.vmem [resolvable:$true] %s92
      %98 = dma.hbm_to_vmem [thread:$0]  %s91, 256, %s93, [#allocation9], 64, 64, 4
    $region29: #{tpu_custom_call.1} parent=1 // pred_fallthru
      _
    // Predicated region
    $region30: #{tpu_custom_call.1} parent=1 // pred_check
      _
    $region31: #{tpu_custom_call.1} parent=1 // pred_check_branch
      %100 = sbr.rel (0) target = $region33
    $region32: #{tpu_custom_call.1} parent=1 // pred_region
      %102 = vsyncadd [#allocation12], 0
      %s103 = sshll.u32 %s7, 4
      %s104 = int_to_ptr.hbm [resolvable:$true] %s103
      %s105 = sshll.u32 [#allocation11], 4
      %s106 = int_to_ptr.vmem [resolvable:$true] %s105
      %111 = dma.hbm_to_vmem [thread:$0]  %s104, 256, %s106, [#allocation12], 64, 64, 4
    $region33: #{tpu_custom_call.1} parent=1 // pred_fallthru
      _
    // Predicated region
    $region34: #{tpu_custom_call.1} parent=1 // pred_check
      _
    $region35: #{tpu_custom_call.1} parent=1 // pred_check_branch
      %113 = sbr.rel (0) target = $region37
    $region36: #{tpu_custom_call.1} parent=1 // pred_region
      %115 = vsyncadd [#allocation12], 0
      %s116 = sshll.u32 %s8, 4
      %s117 = int_to_ptr.hbm [resolvable:$true] %s116
      %s118 = sshll.u32 [#allocation13], 4
      %s119 = int_to_ptr.vmem [resolvable:$true] %s118
      %124 = dma.hbm_to_vmem [thread:$0]  %s117, 256, %s119, [#allocation12], 64, 64, 4
    $region37: #{tpu_custom_call.1} parent=1 // pred_fallthru
      _
    // Predicated region
    $region38: #{tpu_custom_call.1} parent=1 // pred_check
      _
    $region39: #{tpu_custom_call.1} parent=1 // pred_check_branch
      %126 = sbr.rel (0) target = $region41
    $region40: #{tpu_custom_call.1} parent=1 // pred_region
      %128 = vsyncadd [#allocation15], 0
      %s129 = sshll.u32 %s9, 4
      %s130 = int_to_ptr.hbm [resolvable:$true] %s129
      %s131 = sshll.u32 [#allocation14], 4
      %s132 = int_to_ptr.vmem [resolvable:$true] %s131
      %137 = dma.hbm_to_vmem [thread:$0]  %s130, 256, %s132, [#allocation15], 64, 64, 4
    $region41: #{tpu_custom_call.1} parent=1 // pred_fallthru
      _
    // Predicated region
    $region42: #{tpu_custom_call.1} parent=1 // pred_check
      _
    $region43: #{tpu_custom_call.1} parent=1 // pred_check_branch
      %139 = sbr.rel (0) target = $region45
    $region44: #{tpu_custom_call.1} parent=1 // pred_region
      %141 = vsyncadd [#allocation15], 0
      %s142 = sshll.u32 %s10, 4
      %s143 = int_to_ptr.hbm [resolvable:$true] %s142
      %s144 = sshll.u32 [#allocation16], 4
      %s145 = int_to_ptr.vmem [resolvable:$true] %s144
      %150 = dma.hbm_to_vmem [thread:$0]  %s143, 256, %s145, [#allocation15], 64, 64, 4
    $region45: #{tpu_custom_call.1} parent=1 // pred_fallthru
      _
    // Predicated region
    $region46: #{tpu_custom_call.1} parent=1 // pred_check
      _
    $region47: #{tpu_custom_call.1} parent=1 // pred_check_branch
      %152 = sbr.rel (0) target = $region49
    $region48: #{tpu_custom_call.1} parent=1 // pred_region
      %154 = vsyncadd [#allocation18], 0
      %s155 = sshll.u32 %s11, 4
      %s156 = int_to_ptr.hbm [resolvable:$true] %s155
      %s157 = sshll.u32 [#allocation17], 4
      %s158 = int_to_ptr.vmem [resolvable:$true] %s157
      %163 = dma.hbm_to_vmem [thread:$0]  %s156, 256, %s158, [#allocation18], 64, 64, 4
    $region49: #{tpu_custom_call.1} parent=1 // pred_fallthru
      _
    // Predicated region
    $region50: #{tpu_custom_call.1} parent=1 // pred_check
      _
    $region51: #{tpu_custom_call.1} parent=1 // pred_check_branch
      %165 = sbr.rel (0) target = $region53
    $region52: #{tpu_custom_call.1} parent=1 // pred_region
      %167 = vsyncadd [#allocation18], 0
      %s168 = sshll.u32 %s12, 4
      %s169 = int_to_ptr.hbm [resolvable:$true] %s168
      %s170 = sshll.u32 [#allocation19], 4
      %s171 = int_to_ptr.vmem [resolvable:$true] %s170
      %176 = dma.hbm_to_vmem [thread:$0]  %s169, 256, %s171, [#allocation18], 64, 64, 4
    $region53: #{tpu_custom_call.1} parent=1 // pred_fallthru
      _
    // Predicated region
    $region54: #{tpu_custom_call.1} parent=1 // pred_check
      _
    $region55: #{tpu_custom_call.1} parent=1 // pred_check_branch
      %178 = sbr.rel (0) target = $region57
    $region56: #{tpu_custom_call.1} parent=1 // pred_region
      %180 = vsyncadd [#allocation21], 0
      %s181 = sshll.u32 %s13, 4
      %s182 = int_to_ptr.hbm [resolvable:$true] %s181
      %s183 = sshll.u32 [#allocation20], 4
      %s184 = int_to_ptr.vmem [resolvable:$true] %s183
      %189 = dma.hbm_to_vmem [thread:$0]  %s182, 256, %s184, [#allocation21], 64, 64, 4
    $region57: #{tpu_custom_call.1} parent=1 // pred_fallthru
      _
    // Predicated region
    $region58: #{tpu_custom_call.1} parent=1 // pred_check
      _
    $region59: #{tpu_custom_call.1} parent=1 // pred_check_branch
      %191 = sbr.rel (0) target = $region61
    $region60: #{tpu_custom_call.1} parent=1 // pred_region
      _
    $region61: #{tpu_custom_call.1} parent=1 // pred_fallthru
      _
    // Predicated region
    $region62: #{tpu_custom_call.1} parent=1 // pred_check
      _
    $region63: #{tpu_custom_call.1} parent=1 // pred_check_branch
      %193 = sbr.rel (0) target = $region65
    $region64: #{tpu_custom_call.1} parent=1 // pred_region
      %195 = vsyncadd [#allocation21], 0
      %s196 = sshll.u32 %s15, 4
      %s197 = int_to_ptr.hbm [resolvable:$true] %s196
      %s198 = sshll.u32 [#allocation22], 4
      %s199 = int_to_ptr.vmem [resolvable:$true] %s198
      %204 = dma.hbm_to_vmem [thread:$0]  %s197, 256, %s199, [#allocation21], 128, 128, 8
    $region65: #{tpu_custom_call.1} parent=1 // pred_fallthru
      _
    // Predicated region
    $region66: #{tpu_custom_call.1} parent=1 // pred_check
      _
    $region67: #{tpu_custom_call.1} parent=1 // pred_check_branch
      %206 = sbr.rel (0) target = $region69
    $region68: #{tpu_custom_call.1} parent=1 // pred_region
      _
    $region69: #{tpu_custom_call.1} parent=1 // pred_fallthru
      _
    // Predicated region
    $region70: #{tpu_custom_call.1} parent=1 // pred_check
      _
    $region71: #{tpu_custom_call.1} parent=1 // pred_check_branch
      %208 = sbr.rel (0) target = $region73
    $region72: #{tpu_custom_call.1} parent=1 // pred_region
      %210 = dma.done [#allocation3], 256
    $region73: #{tpu_custom_call.1} parent=1 // pred_fallthru
      _
    // Predicated region
    $region74: #{tpu_custom_call.1} parent=1 // pred_check
      _
    $region75: #{tpu_custom_call.1} parent=1 // pred_check_branch
      %212 = sbr.rel (0) target = $region77
    $region76: #{tpu_custom_call.1} parent=1 // pred_region
      %214 = dma.done [#allocation6], 256
    $region77: #{tpu_custom_call.1} parent=1 // pred_fallthru
      _
    // Predicated region
    $region78: #{tpu_custom_call.1} parent=1 // pred_check
      _
    $region79: #{tpu_custom_call.1} parent=1 // pred_check_branch
      %216 = sbr.rel (0) target = $region81
    $region80: #{tpu_custom_call.1} parent=1 // pred_region
      %218 = dma.done [#allocation6], 256
    $region81: #{tpu_custom_call.1} parent=1 // pred_fallthru
      _
    // Predicated region
    $region82: #{tpu_custom_call.1} parent=1 // pred_check
      _
    $region83: #{tpu_custom_call.1} parent=1 // pred_check_branch
      %220 = sbr.rel (0) target = $region85
    $region84: #{tpu_custom_call.1} parent=1 // pred_region
      %222 = dma.done [#allocation9], 256
    $region85: #{tpu_custom_call.1} parent=1 // pred_fallthru
      _
    // Predicated region
    $region86: #{tpu_custom_call.1} parent=1 // pred_check
      _
    $region87: #{tpu_custom_call.1} parent=1 // pred_check_branch
      %224 = sbr.rel (0) target = $region89
    $region88: #{tpu_custom_call.1} parent=1 // pred_region
      %226 = dma.done [#allocation9], 256
    $region89: #{tpu_custom_call.1} parent=1 // pred_fallthru
      _
    // Predicated region
    $region90: #{tpu_custom_call.1} parent=1 // pred_check
      _
    $region91: #{tpu_custom_call.1} parent=1 // pred_check_branch
      %228 = sbr.rel (0) target = $region93
    $region92: #{tpu_custom_call.1} parent=1 // pred_region
      %230 = dma.done [#allocation12], 256
    $region93: #{tpu_custom_call.1} parent=1 // pred_fallthru
      _
    // Predicated region
    $region94: #{tpu_custom_call.1} parent=1 // pred_check
      _
    $region95: #{tpu_custom_call.1} parent=1 // pred_check_branch
      %232 = sbr.rel (0) target = $region97
    $region96: #{tpu_custom_call.1} parent=1 // pred_region
      %234 = dma.done [#allocation12], 256
    $region97: #{tpu_custom_call.1} parent=1 // pred_fallthru
      _
    // Predicated region
    $region98: #{tpu_custom_call.1} parent=1 // pred_check
      _
    $region99: #{tpu_custom_call.1} parent=1 // pred_check_branch
      %236 = sbr.rel (0) target = $region101
    $region100: #{tpu_custom_call.1} parent=1 // pred_region
      %238 = dma.done [#allocation15], 256
    $region101: #{tpu_custom_call.1} parent=1 // pred_fallthru
      _
    // Predicated region
    $region102: #{tpu_custom_call.1} parent=1 // pred_check
      _
    $region103: #{tpu_custom_call.1} parent=1 // pred_check_branch
      %240 = sbr.rel (0) target = $region105
    $region104: #{tpu_custom_call.1} parent=1 // pred_region
      %242 = dma.done [#allocation15], 256
    $region105: #{tpu_custom_call.1} parent=1 // pred_fallthru
      _
    // Predicated region
    $region106: #{tpu_custom_call.1} parent=1 // pred_check
      _
    $region107: #{tpu_custom_call.1} parent=1 // pred_check_branch
      %244 = sbr.rel (0) target = $region109
    $region108: #{tpu_custom_call.1} parent=1 // pred_region
      %246 = dma.done [#allocation18], 256
    $region109: #{tpu_custom_call.1} parent=1 // pred_fallthru
      _
    // Predicated region
    $region110: #{tpu_custom_call.1} parent=1 // pred_check
      _
    $region111: #{tpu_custom_call.1} parent=1 // pred_check_branch
      %248 = sbr.rel (0) target = $region113
    $region112: #{tpu_custom_call.1} parent=1 // pred_region
      %250 = dma.done [#allocation18], 256
    $region113: #{tpu_custom_call.1} parent=1 // pred_fallthru
      _
    // Predicated region
    $region114: #{tpu_custom_call.1} parent=1 // pred_check
      _
    $region115: #{tpu_custom_call.1} parent=1 // pred_check_branch
      %252 = sbr.rel (0) target = $region117
    $region116: #{tpu_custom_call.1} parent=1 // pred_region
      %254 = dma.done [#allocation21], 256
    $region117: #{tpu_custom_call.1} parent=1 // pred_fallthru
      _
    // Predicated region
    $region118: #{tpu_custom_call.1} parent=1 // pred_check
      _
    $region119: #{tpu_custom_call.1} parent=1 // pred_check_branch
      %256 = sbr.rel (0) target = $region121
    $region120: #{tpu_custom_call.1} parent=1 // pred_region
      %258 = dma.done [#allocation21], 256
    $region121: #{tpu_custom_call.1} parent=1 // pred_fallthru
      _
    %v260 = vlaneseq
    %v261 = vand.u32 %v260, 127
    %vm262 = vcmp.ge.s32.totalorder %v261, 0
    %vm263 = vcmp.lt.s32.totalorder %v261, 8
    %vm264 = vmand %vm262, %vm263
    %vm265 = vcmp.ge.s32.totalorder %v261, 8
    %vm266 = vcmp.lt.s32.totalorder %v261, 16
    %vm267 = vmand %vm265, %vm266
    %vm268 = vcmp.ge.s32.totalorder %v261, 16
    %vm269 = vcmp.lt.s32.totalorder %v261, 24
    %vm270 = vmand %vm268, %vm269
    %vm271 = vcmp.ge.s32.totalorder %v261, 24
    %vm272 = vcmp.lt.s32.totalorder %v261, 32
    %vm273 = vmand %vm271, %vm272
    %v274 = vld [vmem:[#allocation2] sm:$0xff]
    %v275 = vld [vmem:[#allocation2 + $0x8] sm:$0xff]
    %v276 = vld [vmem:[%s1] sm:$0xff]
    %v277 = vld [vmem:[%s1 + $0x8] sm:$0xff]
    %v278 = vld [vmem:[%s1 + $0x10] sm:$0xff]
    %v279 = vld [vmem:[#allocation5] sm:$0xff]
    %v280 = vld [vmem:[#allocation5 + $0x8] sm:$0xff]
    %v281 = vld [vmem:[%s3] sm:$0xff]
    %v282 = vld [vmem:[%s3 + $0x8] sm:$0xff]
    %v283 = vld [vmem:[%s3 + $0x10] sm:$0xff]
    %v284 = vld [vmem:[#allocation7] sm:$0xff]
    %v285 = vld [vmem:[#allocation7 + $0x8] sm:$0xff]
    %v286 = vld [vmem:[#allocation8] sm:$0xff]
    %v287 = vld [vmem:[#allocation8 + $0x8] sm:$0xff]
    %v288 = vadd.f32 %v274, %v279
    %v289 = vadd.f32 %v275, %v280
    %v290 = vld [vmem:[#allocation10] sm:$0xf]
    %v291 = vld [vmem:[#allocation10 + $0x4] sm:$0xf]
    %v292 = vld [vmem:[#allocation10 + $0x8] sm:$0xf]
    %v293 = vld [vmem:[#allocation10 + $0xc] sm:$0xf]
    %v294 = vpack.c.bf16 %v289, %v288
    %v299 = vunpack.c.l.b16 %v290
    %v300 = vunpack.c.l.b16 %v291
    %v301 = vunpack.c.l.b16 %v292
    %v302 = vunpack.c.l.b16 %v293
    %v303 = vpack.c.b16 %v300, %v299
    %v304 = vpack.c.b16 %v302, %v301
    %vm307 = vcmask 261120
    %v309 = vsel %vm307, %v294, 0
    %311 = vmatpush.bf16.msra.mxu0 0
    %312 = vmatpush.bf16.msra.mxu0 0
    %313 = vmatpush.bf16.msra.mxu0 0
    %314 = vmatpush.bf16.msra.mxu0 0
    %315 = vmatpush.bf16.msra.mxu0 0
    %316 = vmatpush.bf16.msra.mxu0 0
    %317 = vmatpush.bf16.msra.mxu0 %v304
    %318 = vmatpush.bf16.msra.mxu0 %v303
    %319 = vmatmul.bf16.gmra.mxu0 %v309
    %v320 = vpop.f32.mrf.mxu0
    %v321 = vadd.f32 0.0, %v320
    %v322 = vpop.f32.mrf.mxu0
    %v323 = vadd.f32 0.0, %v322
    %324 = vdwg.mxu0
    %v325 = vld [vmem:[#allocation22] sm:$0x1]
    %v326 = vperm.slane %v325, 0
    %v327 = vadd.f32 %v321, %v326
    %v328 = vadd.f32 %v323, %v326
    %v329 = vld [vmem:[#allocation22 + $0x1] sm:$0x1]
    %v330 = vperm.slane %v329, 0
    %332 = vrot.lane.b32.xlu0 %v330, 32
    %v333 = vpop.permute.xlu0 %332
    %v335 = vadd.f32 %v321, %v333
    %v336 = vadd.f32 %v323, %v333
    %v337 = vld [vmem:[#allocation11] sm:$0xf]
    %v338 = vld [vmem:[#allocation11 + $0x4] sm:$0xf]
    %v339 = vld [vmem:[#allocation11 + $0x8] sm:$0xf]
    %v340 = vld [vmem:[#allocation11 + $0xc] sm:$0xf]
    %v341 = vpack.c.bf16 %v275, %v274
    %v342 = vld [vmem:[#allocation22 + $0x2] sm:$0x1]
    %v343 = vperm.slane %v342, 0
    %v348 = vunpack.c.l.b16 %v337
    %v349 = vunpack.c.l.b16 %v338
    %v350 = vunpack.c.l.b16 %v339
    %v351 = vunpack.c.l.b16 %v340
    %v352 = vpack.c.b16 %v349, %v348
    %v353 = vpack.c.b16 %v351, %v350
    %v357 = vsel %vm307, %v341, 0
    %359 = vmatpush.bf16.msra.mxu0 0
    %360 = vmatpush.bf16.msra.mxu0 0
    %361 = vmatpush.bf16.msra.mxu0 0
    %362 = vmatpush.bf16.msra.mxu0 0
    %363 = vmatpush.bf16.msra.mxu0 0
    %364 = vmatpush.bf16.msra.mxu0 0
    %365 = vmatpush.bf16.msra.mxu0 %v353
    %366 = vmatpush.bf16.msra.mxu0 %v352
    %367 = vmatmul.bf16.gmra.mxu0 %v357
    %v368 = vpop.f32.mrf.mxu0
    %v369 = vadd.f32 %v343, %v368
    %v370 = vpop.f32.mrf.mxu0
    %v371 = vadd.f32 %v343, %v370
    %372 = vdwg.mxu0
    %v373 = vld [vmem:[#allocation13] sm:$0xf]
    %v374 = vld [vmem:[#allocation13 + $0x4] sm:$0xf]
    %v375 = vld [vmem:[#allocation13 + $0x8] sm:$0xf]
    %v376 = vld [vmem:[#allocation13 + $0xc] sm:$0xf]
    %v377 = vld [vmem:[#allocation22 + $0x3] sm:$0x1]
    %v378 = vmul.f32 %v327, 0.35355338
    %v379 = vmul.f32 %v328, 0.35355338
    %v380 = vsel %vm264, 1, 0
    %vm381 = vcmp.eq.s32.totalorder %v380, 1
    %v382 = vsel %vm381, %v378, 0.0
    %v383 = vsel %vm381, %v379, 0.0
    %v384 = vpack.c.bf16 %v383, %v382
    %v385 = vpack.c.bf16 %v336, %v335
    %387 = vrot.lane.b32.xlu0 %v385, 96
    %v388 = vpop.permute.xlu0 %387
    %v390 = vsel %vm307, %v384, 0
    %v393 = vsel %vm307, %v388, 0
    %395 = vmatpush.bf16.xpose.msra.mxu0 0
    %396 = vmatpush.bf16.xpose.msra.mxu0 0
    %397 = vmatpush.bf16.xpose.msra.mxu0 0
    %398 = vmatpush.bf16.xpose.msra.mxu0 0
    %399 = vmatpush.bf16.xpose.msra.mxu0 0
    %400 = vmatpush.bf16.xpose.msra.mxu0 0
    %401 = vmatpush.bf16.xpose.msra.mxu0 0
    %402 = vmatpush.bf16.xpose.msra.mxu0 %v393
    %403 = vmatmul.bf16.gmra.mxu0 %v390
    %v404 = vpop.f32.mrf.mxu0
    %v405 = vadd.f32 %v284, %v404
    %v406 = vpop.f32.mrf.mxu0
    %v407 = vadd.f32 %v285, %v406
    %408 = vdwg.mxu0
    %vm409 = vcmask 130048
    %v410 = vsel %vm409, %v405, -inf
    %411 = vmax.xlane.f32.xlu0 %v410
    %v412 = vpop.xlane.xlu0 %411
    %v413 = vsel %vm409, %v407, -inf
    %414 = vmax.xlane.f32.xlu0 %v413
    %v415 = vpop.xlane.xlu0 %414
    %v416 = vsub.f32 %v405, %v412
    %v417 = vsub.f32 %v407, %v415
    %v418 = vmul.f32 %v416, 1.442695
    %v419 = vpow.pop %v418
    %v420 = vmul.f32 %v417, 1.442695
    %v421 = vpow.pop %v420
    %v422 = vsel %vm409, %v419, 0.0
    %423 = vadd.xlane.f32.xlu0 %v422
    %v424 = vpop.xlane.xlu0 %423
    %v425 = vsel %vm409, %v421, 0.0
    %426 = vadd.xlane.f32.xlu0 %v425
    %v427 = vpop.xlane.xlu0 %426
    %v428 = vrcp.pop %v424
    %v429 = vrcp.pop %v427
    %v430 = vmul.f32 %v419, %v428
    %v431 = vmul.f32 %v421, %v429
    %v432 = vsel %vm381, %v369, 0.0
    %v433 = vsel %vm381, %v371, 0.0
    %v434 = vpack.c.bf16 %v431, %v430
    %v435 = vpack.c.bf16 %v433, %v432
    %v436 = vsel %vm267, 1, 0
    %vm437 = vcmp.eq.s32.totalorder %v436, 1
    %v438 = vsel %vm437, %v378, 0.0
    %v439 = vsel %vm437, %v379, 0.0
    %v440 = vpack.c.bf16 %v439, %v438
    %v442 = vsel %vm307, %v440, 0
    %444 = vmatpush.bf16.xpose.msra.mxu0 0
    %445 = vmatpush.bf16.xpose.msra.mxu0 0
    %446 = vmatpush.bf16.xpose.msra.mxu0 0
    %447 = vmatpush.bf16.xpose.msra.mxu0 0
    %448 = vmatpush.bf16.xpose.msra.mxu0 0
    %449 = vmatpush.bf16.xpose.msra.mxu0 0
    %450 = vmatpush.bf16.xpose.msra.mxu0 0
    %451 = vmatpush.bf16.xpose.msra.mxu0 %v393
    %452 = vmatmul.bf16.gmra.mxu0 %v442
    %v453 = vpop.f32.mrf.mxu0
    %v454 = vadd.f32 %v284, %v453
    %v455 = vpop.f32.mrf.mxu0
    %v456 = vadd.f32 %v285, %v455
    %457 = vdwg.mxu0
    %v458 = vsel %vm409, %v454, -inf
    %459 = vmax.xlane.f32.xlu0 %v458
    %v460 = vpop.xlane.xlu0 %459
    %v461 = vsel %vm409, %v456, -inf
    %462 = vmax.xlane.f32.xlu0 %v461
    %v463 = vpop.xlane.xlu0 %462
    %v464 = vsub.f32 %v454, %v460
    %v465 = vsub.f32 %v456, %v463
    %v466 = vmul.f32 %v464, 1.442695
    %v467 = vpow.pop %v466
    %v468 = vmul.f32 %v465, 1.442695
    %v469 = vpow.pop %v468
    %v470 = vsel %vm409, %v467, 0.0
    %471 = vadd.xlane.f32.xlu0 %v470
    %v472 = vpop.xlane.xlu0 %471
    %v473 = vsel %vm409, %v469, 0.0
    %474 = vadd.xlane.f32.xlu0 %v473
    %v475 = vpop.xlane.xlu0 %474
    %v476 = vrcp.pop %v472
    %v477 = vrcp.pop %v475
    %v478 = vmul.f32 %v467, %v476
    %v479 = vmul.f32 %v469, %v477
    %v480 = vsel %vm437, %v369, 0.0
    %v481 = vsel %vm437, %v371, 0.0
    %v482 = vpack.c.bf16 %v479, %v478
    %v483 = vpack.c.bf16 %v481, %v480
    %v485 = vsel %vm409, %v482, 0
    %487 = vmatpush.bf16.msra.mxu0 0
    %488 = vmatpush.bf16.msra.mxu0 0
    %489 = vmatpush.bf16.msra.mxu0 0
    %490 = vmatpush.bf16.msra.mxu0 0
    %491 = vmatpush.bf16.msra.mxu0 0
    %492 = vmatpush.bf16.msra.mxu0 0
    %493 = vmatpush.bf16.msra.mxu0 0
    %494 = vmatpush.bf16.msra.mxu0 %v483
    %495 = vmatmul.bf16.gmra.mxu0 %v485
    %v496 = vpop.f32.mrf.mxu0
    %v497 = vadd.f32 0.0, %v496
    %v498 = vpop.f32.mrf.mxu0
    %v499 = vadd.f32 0.0, %v498
    %500 = vdwg.mxu0
    %v502 = vsel %vm409, %v434, 0
    %504 = vmatpush.bf16.msra.mxu0 0
    %505 = vmatpush.bf16.msra.mxu0 0
    %506 = vmatpush.bf16.msra.mxu0 0
    %507 = vmatpush.bf16.msra.mxu0 0
    %508 = vmatpush.bf16.msra.mxu0 0
    %509 = vmatpush.bf16.msra.mxu0 0
    %510 = vmatpush.bf16.msra.mxu0 0
    %511 = vmatpush.bf16.msra.mxu0 %v435
    %512 = vmatmul.bf16.gmra.mxu0 %v502
    %v513 = vpop.f32.mrf.mxu0
    %v514 = vadd.f32 %v497, %v513
    %v515 = vpop.f32.mrf.mxu0
    %v516 = vadd.f32 %v499, %v515
    %517 = vdwg.mxu0
    %v518 = vsel %vm270, 1, 0
    %vm519 = vcmp.eq.s32.totalorder %v518, 1
    %v520 = vsel %vm519, %v378, 0.0
    %v521 = vsel %vm519, %v379, 0.0
    %v522 = vpack.c.bf16 %v521, %v520
    %v524 = vsel %vm307, %v522, 0
    %526 = vmatpush.bf16.xpose.msra.mxu0 0
    %527 = vmatpush.bf16.xpose.msra.mxu0 0
    %528 = vmatpush.bf16.xpose.msra.mxu0 0
    %529 = vmatpush.bf16.xpose.msra.mxu0 0
    %530 = vmatpush.bf16.xpose.msra.mxu0 0
    %531 = vmatpush.bf16.xpose.msra.mxu0 0
    %532 = vmatpush.bf16.xpose.msra.mxu0 0
    %533 = vmatpush.bf16.xpose.msra.mxu0 %v393
    %534 = vmatmul.bf16.gmra.mxu0 %v524
    %v535 = vpop.f32.mrf.mxu0
    %v536 = vadd.f32 %v284, %v535
    %v537 = vpop.f32.mrf.mxu0
    %v538 = vadd.f32 %v285, %v537
    %539 = vdwg.mxu0
    %v540 = vsel %vm409, %v536, -inf
    %541 = vmax.xlane.f32.xlu0 %v540
    %v542 = vpop.xlane.xlu0 %541
    %v543 = vsel %vm409, %v538, -inf
    %544 = vmax.xlane.f32.xlu0 %v543
    %v545 = vpop.xlane.xlu0 %544
    %v546 = vsub.f32 %v536, %v542
    %v547 = vsub.f32 %v538, %v545
    %v548 = vmul.f32 %v546, 1.442695
    %v549 = vpow.pop %v548
    %v550 = vmul.f32 %v547, 1.442695
    %v551 = vpow.pop %v550
    %v552 = vsel %vm409, %v549, 0.0
    %553 = vadd.xlane.f32.xlu0 %v552
    %v554 = vpop.xlane.xlu0 %553
    %v555 = vsel %vm409, %v551, 0.0
    %556 = vadd.xlane.f32.xlu0 %v555
    %v557 = vpop.xlane.xlu0 %556
    %v558 = vrcp.pop %v554
    %v559 = vrcp.pop %v557
    %v560 = vmul.f32 %v549, %v558
    %v561 = vmul.f32 %v551, %v559
    %v562 = vsel %vm519, %v369, 0.0
    %v563 = vsel %vm519, %v371, 0.0
    %v564 = vpack.c.bf16 %v561, %v560
    %v565 = vpack.c.bf16 %v563, %v562
    %v567 = vsel %vm409, %v564, 0
    %569 = vmatpush.bf16.msra.mxu0 0
    %570 = vmatpush.bf16.msra.mxu0 0
    %571 = vmatpush.bf16.msra.mxu0 0
    %572 = vmatpush.bf16.msra.mxu0 0
    %573 = vmatpush.bf16.msra.mxu0 0
    %574 = vmatpush.bf16.msra.mxu0 0
    %575 = vmatpush.bf16.msra.mxu0 0
    %576 = vmatpush.bf16.msra.mxu0 %v565
    %577 = vmatmul.bf16.gmra.mxu0 %v567
    %v578 = vpop.f32.mrf.mxu0
    %v579 = vadd.f32 0.0, %v578
    %v580 = vpop.f32.mrf.mxu0
    %v581 = vadd.f32 0.0, %v580
    %582 = vdwg.mxu0
    %v583 = vadd.f32 %v514, %v579
    %v584 = vadd.f32 %v516, %v581
    %v585 = vsel %vm273, 1, 0
    %vm586 = vcmp.eq.s32.totalorder %v585, 1
    %v587 = vsel %vm586, %v378, 0.0
    %v588 = vsel %vm586, %v379, 0.0
    %v589 = vpack.c.bf16 %v588, %v587
    %v591 = vsel %vm307, %v589, 0
    %593 = vmatpush.bf16.xpose.msra.mxu0 0
    %594 = vmatpush.bf16.xpose.msra.mxu0 0
    %595 = vmatpush.bf16.xpose.msra.mxu0 0
    %596 = vmatpush.bf16.xpose.msra.mxu0 0
    %597 = vmatpush.bf16.xpose.msra.mxu0 0
    %598 = vmatpush.bf16.xpose.msra.mxu0 0
    %599 = vmatpush.bf16.xpose.msra.mxu0 0
    %600 = vmatpush.bf16.xpose.msra.mxu0 %v393
    %601 = vmatmul.bf16.gmra.mxu0 %v591
    %v602 = vpop.f32.mrf.mxu0
    %v603 = vadd.f32 %v284, %v602
    %v604 = vpop.f32.mrf.mxu0
    %v605 = vadd.f32 %v285, %v604
    %606 = vdwg.mxu0
    %v607 = vsel %vm409, %v603, -inf
    %608 = vmax.xlane.f32.xlu0 %v607
    %v609 = vpop.xlane.xlu0 %608
    %v610 = vsel %vm409, %v605, -inf
    %611 = vmax.xlane.f32.xlu0 %v610
    %v612 = vpop.xlane.xlu0 %611
    %v613 = vsub.f32 %v603, %v609
    %v614 = vsub.f32 %v605, %v612
    %v615 = vmul.f32 %v613, 1.442695
    %v616 = vpow.pop %v615
    %v617 = vmul.f32 %v614, 1.442695
    %v618 = vpow.pop %v617
    %v619 = vsel %vm409, %v616, 0.0
    %620 = vadd.xlane.f32.xlu0 %v619
    %v621 = vpop.xlane.xlu0 %620
    %v622 = vsel %vm409, %v618, 0.0
    %623 = vadd.xlane.f32.xlu0 %v622
    %v624 = vpop.xlane.xlu0 %623
    %v625 = vrcp.pop %v621
    %v626 = vrcp.pop %v624
    %v627 = vmul.f32 %v616, %v625
    %v628 = vmul.f32 %v618, %v626
    %v629 = vsel %vm586, %v369, 0.0
    %v630 = vsel %vm586, %v371, 0.0
    %v631 = vpack.c.bf16 %v628, %v627
    %v632 = vpack.c.bf16 %v630, %v629
    %v634 = vsel %vm409, %v631, 0
    %636 = vmatpush.bf16.msra.mxu0 0
    %637 = vmatpush.bf16.msra.mxu0 0
    %638 = vmatpush.bf16.msra.mxu0 0
    %639 = vmatpush.bf16.msra.mxu0 0
    %640 = vmatpush.bf16.msra.mxu0 0
    %641 = vmatpush.bf16.msra.mxu0 0
    %642 = vmatpush.bf16.msra.mxu0 0
    %643 = vmatpush.bf16.msra.mxu0 %v632
    %644 = vmatmul.bf16.gmra.mxu0 %v634
    %v645 = vpop.f32.mrf.mxu0
    %v646 = vadd.f32 0.0, %v645
    %v647 = vpop.f32.mrf.mxu0
    %v648 = vadd.f32 0.0, %v647
    %649 = vdwg.mxu0
    %v650 = vadd.f32 %v583, %v646
    %v651 = vadd.f32 %v584, %v648
    %v652 = vpack.c.bf16 %v651, %v650
    %v653 = vperm.slane %v377, 0
    %v658 = vunpack.c.l.b16 %v373
    %v659 = vunpack.c.l.b16 %v374
    %v660 = vunpack.c.l.b16 %v375
    %v661 = vunpack.c.l.b16 %v376
    %v662 = vpack.c.b16 %v659, %v658
    %v663 = vpack.c.b16 %v661, %v660
    %v667 = vsel %vm307, %v652, 0
    %669 = vmatpush.bf16.msra.mxu0 0
    %670 = vmatpush.bf16.msra.mxu0 0
    %671 = vmatpush.bf16.msra.mxu0 0
    %672 = vmatpush.bf16.msra.mxu0 0
    %673 = vmatpush.bf16.msra.mxu0 0
    %674 = vmatpush.bf16.msra.mxu0 0
    %675 = vmatpush.bf16.msra.mxu0 %v663
    %676 = vmatpush.bf16.msra.mxu0 %v662
    %677 = vmatmul.bf16.gmra.mxu0 %v667
    %v678 = vpop.f32.mrf.mxu0
    %v679 = vadd.f32 %v653, %v678
    %v680 = vpop.f32.mrf.mxu0
    %v681 = vadd.f32 %v653, %v680
    %682 = vdwg.mxu0
    %v683 = vadd.f32 %v274, %v679
    %v684 = vadd.f32 %v275, %v681
    %v685 = vld [vmem:[#allocation22 + $0x8] sm:$0x1]
    %v686 = vld [vmem:[#allocation22 + $0x9] sm:$0x1]
    %v687 = vsel %vm307, %v683, 0.0
    %688 = vadd.xlane.f32.xlu0 %v687
    %v689 = vpop.xlane.xlu0 %688
    %v690 = vsel %vm307, %v684, 0.0
    %691 = vadd.xlane.f32.xlu0 %v690
    %v692 = vpop.xlane.xlu0 %691
    %v693 = vrcp.pop 32.0
    %v694 = vmul.f32 32.0, %v693
    %v695 = vsub.f32 1.0, %v694
    %v696 = vmul.f32 %v693, %v695
    %v697 = vadd.f32 %v693, %v696
    %vm698 = vweird.f32 %v693
    %v699 = vsel %vm698, %v693, %v697
    %v700 = vmul.f32 %v689, %v699
    %v701 = vmul.f32 %v692, %v699
    %v702 = vsub.f32 %v683, %v700
    %v703 = vsub.f32 %v684, %v701
    %v704 = vmul.f32 %v702, %v702
    %v705 = vmul.f32 %v703, %v703
    %v706 = vsel %vm307, %v704, 0.0
    %707 = vadd.xlane.f32.xlu0 %v706
    %v708 = vpop.xlane.xlu0 %707
    %v709 = vsel %vm307, %v705, 0.0
    %710 = vadd.xlane.f32.xlu0 %v709
    %v711 = vpop.xlane.xlu0 %710
    %v712 = vmul.f32 %v708, %v699
    %v713 = vmul.f32 %v711, %v699
    %v714 = vadd.f32 %v712, 1e-05
    %v715 = vadd.f32 %v713, 1e-05
    %v716 = vrsqrt.pop %v714
    %v717 = vmul.f32 %v716, %v714
    %v718 = vmul.f32 %v717, %v716
    %v719 = vmul.f32 0.5, %v718
    %v720 = vsub.f32 1.5, %v719
    %v721 = vmul.f32 %v716, %v720
    %vm722 = vweird.f32 %v714
    %vm723 = vweird.f32 %v716
    %vm724 = vmor %vm722, %vm723
    %v725 = vsel %vm724, %v716, %v721
    %v726 = vrsqrt.pop %v715
    %v727 = vmul.f32 %v726, %v715
    %v728 = vmul.f32 %v727, %v726
    %v729 = vmul.f32 0.5, %v728
    %v730 = vsub.f32 1.5, %v729
    %v731 = vmul.f32 %v726, %v730
    %vm732 = vweird.f32 %v715
    %vm733 = vweird.f32 %v726
    %vm734 = vmor %vm732, %vm733
    %v735 = vsel %vm734, %v726, %v731
    %v736 = vmul.f32 %v702, %v725
    %v737 = vmul.f32 %v703, %v735
    %v738 = vperm.slane %v685, 0
    %v739 = vmul.f32 %v736, %v738
    %v740 = vmul.f32 %v737, %v738
    %v741 = vperm.slane %v686, 0
    %v742 = vadd.f32 %v739, %v741
    %v743 = vadd.f32 %v740, %v741
    %v744 = vadd.f32 %v742, %v279
    %v745 = vadd.f32 %v743, %v280
    %v746 = vld [vmem:[#allocation14] sm:$0xf]
    %v747 = vld [vmem:[#allocation14 + $0x4] sm:$0xf]
    %v748 = vld [vmem:[#allocation14 + $0x8] sm:$0xf]
    %v749 = vld [vmem:[#allocation14 + $0xc] sm:$0xf]
    %v750 = vpack.c.bf16 %v745, %v744
    %v751 = vld [vmem:[#allocation22 + $0x4] sm:$0x1]
    %v752 = vperm.slane %v751, 0
    %v757 = vunpack.c.l.b16 %v746
    %v758 = vunpack.c.l.b16 %v747
    %v759 = vunpack.c.l.b16 %v748
    %v760 = vunpack.c.l.b16 %v749
    %v761 = vpack.c.b16 %v758, %v757
    %v762 = vpack.c.b16 %v760, %v759
    %v766 = vsel %vm307, %v750, 0
    %768 = vmatpush.bf16.msra.mxu0 0
    %769 = vmatpush.bf16.msra.mxu0 0
    %770 = vmatpush.bf16.msra.mxu0 0
    %771 = vmatpush.bf16.msra.mxu0 0
    %772 = vmatpush.bf16.msra.mxu0 0
    %773 = vmatpush.bf16.msra.mxu0 0
    %774 = vmatpush.bf16.msra.mxu0 %v762
    %775 = vmatpush.bf16.msra.mxu0 %v761
    %776 = vmatmul.bf16.gmra.mxu0 %v766
    %v777 = vpop.f32.mrf.mxu0
    %v778 = vadd.f32 %v752, %v777
    %v779 = vpop.f32.mrf.mxu0
    %v780 = vadd.f32 %v752, %v779
    %781 = vdwg.mxu0
    %v782 = vadd.f32 %v276, %v281
    %v783 = vadd.f32 %v277, %v282
    %v784 = vadd.f32 %v278, %v283
    %v785 = vld [vmem:[#allocation16] sm:$0xf]
    %v786 = vld [vmem:[#allocation16 + $0x4] sm:$0xf]
    %v787 = vld [vmem:[#allocation16 + $0x8] sm:$0xf]
    %v788 = vld [vmem:[#allocation16 + $0xc] sm:$0xf]
    %v789 = vpack.c.bf16 %v783, %v782
    %v790 = vpack.c.bf16 %v784, %v784
    %v791 = vld [vmem:[#allocation22 + $0x5] sm:$0x1]
    %v792 = vperm.slane %v791, 0
    %v797 = vunpack.c.l.b16 %v785
    %v798 = vunpack.c.l.b16 %v786
    %v799 = vunpack.c.l.b16 %v787
    %v800 = vunpack.c.l.b16 %v788
    %v801 = vpack.c.b16 %v798, %v797
    %v802 = vpack.c.b16 %v800, %v799
    %v806 = vsel %vm307, %v789, 0
    %v809 = vsel %vm307, %v790, 0
    %811 = vmatpush.bf16.msra.mxu0 0
    %812 = vmatpush.bf16.msra.mxu0 0
    %813 = vmatpush.bf16.msra.mxu0 0
    %814 = vmatpush.bf16.msra.mxu0 0
    %815 = vmatpush.bf16.msra.mxu0 0
    %816 = vmatpush.bf16.msra.mxu0 0
    %817 = vmatpush.bf16.msra.mxu0 %v802
    %818 = vmatpush.bf16.msra.mxu0 %v801
    %819 = vmatmul.bf16.gmra.mxu0 %v806
    %v820 = vpop.f32.mrf.mxu0
    %v821 = vadd.f32 %v792, %v820
    %v822 = vpop.f32.mrf.mxu0
    %v823 = vadd.f32 %v792, %v822
    %824 = vmatmul.bf16.gmra.mxu0 %v809
    %v825 = vpop.f32.mrf.mxu0
    %v826 = vadd.f32 %v792, %v825
    %v827 = vpop.f32.mrf.mxu0
    %828 = vdwg.mxu0
    %v829 = vld [vmem:[#allocation17] sm:$0xf]
    %v830 = vld [vmem:[#allocation17 + $0x4] sm:$0xf]
    %v831 = vld [vmem:[#allocation17 + $0x8] sm:$0xf]
    %v832 = vld [vmem:[#allocation17 + $0xc] sm:$0xf]
    %v833 = vpack.c.bf16 %v277, %v276
    %v834 = vpack.c.bf16 %v278, %v278
    %v835 = vld [vmem:[#allocation22 + $0x6] sm:$0x1]
    %v836 = vperm.slane %v835, 0
    %v841 = vunpack.c.l.b16 %v829
    %v842 = vunpack.c.l.b16 %v830
    %v843 = vunpack.c.l.b16 %v831
    %v844 = vunpack.c.l.b16 %v832
    %v845 = vpack.c.b16 %v842, %v841
    %v846 = vpack.c.b16 %v844, %v843
    %v850 = vsel %vm307, %v833, 0
    %v853 = vsel %vm307, %v834, 0
    %855 = vmatpush.bf16.msra.mxu0 0
    %856 = vmatpush.bf16.msra.mxu0 0
    %857 = vmatpush.bf16.msra.mxu0 0
    %858 = vmatpush.bf16.msra.mxu0 0
    %859 = vmatpush.bf16.msra.mxu0 0
    %860 = vmatpush.bf16.msra.mxu0 0
    %861 = vmatpush.bf16.msra.mxu0 %v846
    %862 = vmatpush.bf16.msra.mxu0 %v845
    %863 = vmatmul.bf16.gmra.mxu0 %v850
    %v864 = vpop.f32.mrf.mxu0
    %v865 = vadd.f32 %v836, %v864
    %v866 = vpop.f32.mrf.mxu0
    %v867 = vadd.f32 %v836, %v866
    %868 = vmatmul.bf16.gmra.mxu0 %v853
    %v869 = vpop.f32.mrf.mxu0
    %v870 = vadd.f32 %v836, %v869
    %v871 = vpop.f32.mrf.mxu0
    %872 = vdwg.mxu0
    %v873 = vld [vmem:[#allocation19] sm:$0xf]
    %v874 = vld [vmem:[#allocation19 + $0x4] sm:$0xf]
    %v875 = vld [vmem:[#allocation19 + $0x8] sm:$0xf]
    %v876 = vld [vmem:[#allocation19 + $0xc] sm:$0xf]
    %v877 = vld [vmem:[#allocation22 + $0x7] sm:$0x1]
    %v878 = vmul.f32 %v778, 0.35355338
    %v879 = vmul.f32 %v780, 0.35355338
    %v880 = vsel %vm381, %v878, 0.0
    %v881 = vsel %vm381, %v879, 0.0
    %v882 = vpack.c.bf16 %v881, %v880
    %v883 = vpack.c.bf16 %v823, %v821
    %v884 = vpack.c.bf16 %v826, %v826
    %v886 = vsel %vm307, %v882, 0
    %v889 = vsel %vm307, %v883, 0
    %v892 = vsel %vm307, %v884, 0
    %894 = vmatpush.bf16.xpose.msra.mxu0 0
    %895 = vmatpush.bf16.xpose.msra.mxu0 0
    %896 = vmatpush.bf16.xpose.msra.mxu0 0
    %897 = vmatpush.bf16.xpose.msra.mxu0 0
    %898 = vmatpush.bf16.xpose.msra.mxu0 0
    %899 = vmatpush.bf16.xpose.msra.mxu0 0
    %900 = vmatpush.bf16.xpose.msra.mxu0 %v892
    %901 = vmatpush.bf16.xpose.msra.mxu0 %v889
    %902 = vmatmul.bf16.gmra.mxu0 %v886
    %v903 = vpop.f32.mrf.mxu0
    %v904 = vadd.f32 %v286, %v903
    %v905 = vpop.f32.mrf.mxu0
    %v906 = vadd.f32 %v287, %v905
    %907 = vdwg.mxu0
    %vm908 = vcmask 195584
    %v909 = vsel %vm908, %v904, -inf
    %910 = vmax.xlane.f32.xlu0 %v909
    %v911 = vpop.xlane.xlu0 %910
    %v912 = vsel %vm908, %v906, -inf
    %913 = vmax.xlane.f32.xlu0 %v912
    %v914 = vpop.xlane.xlu0 %913
    %v915 = vsub.f32 %v904, %v911
    %v916 = vsub.f32 %v906, %v914
    %v917 = vmul.f32 %v915, 1.442695
    %v918 = vpow.pop %v917
    %v919 = vmul.f32 %v916, 1.442695
    %v920 = vpow.pop %v919
    %v921 = vsel %vm908, %v918, 0.0
    %922 = vadd.xlane.f32.xlu0 %v921
    %v923 = vpop.xlane.xlu0 %922
    %v924 = vsel %vm908, %v920, 0.0
    %925 = vadd.xlane.f32.xlu0 %v924
    %v926 = vpop.xlane.xlu0 %925
    %v927 = vrcp.pop %v923
    %v928 = vrcp.pop %v926
    %v929 = vmul.f32 %v918, %v927
    %v930 = vmul.f32 %v920, %v928
    %v931 = vsel %vm381, %v865, 0.0
    %v932 = vsel %vm381, %v867, 0.0
    %v933 = vsel %vm381, %v870, 0.0
    %v934 = vpack.c.bf16 %v930, %v929
    %v935 = vpack.c.bf16 %v932, %v931
    %v936 = vpack.c.bf16 %v933, %v933
    %v937 = vsel %vm437, %v878, 0.0
    %v938 = vsel %vm437, %v879, 0.0
    %v939 = vpack.c.bf16 %v938, %v937
    %v941 = vsel %vm307, %v939, 0
    %943 = vmatpush.bf16.xpose.msra.mxu0 0
    %944 = vmatpush.bf16.xpose.msra.mxu0 0
    %945 = vmatpush.bf16.xpose.msra.mxu0 0
    %946 = vmatpush.bf16.xpose.msra.mxu0 0
    %947 = vmatpush.bf16.xpose.msra.mxu0 0
    %948 = vmatpush.bf16.xpose.msra.mxu0 0
    %949 = vmatpush.bf16.xpose.msra.mxu0 %v892
    %950 = vmatpush.bf16.xpose.msra.mxu0 %v889
    %951 = vmatmul.bf16.gmra.mxu0 %v941
    %v952 = vpop.f32.mrf.mxu0
    %v953 = vadd.f32 %v286, %v952
    %v954 = vpop.f32.mrf.mxu0
    %v955 = vadd.f32 %v287, %v954
    %956 = vdwg.mxu0
    %v957 = vsel %vm908, %v953, -inf
    %958 = vmax.xlane.f32.xlu0 %v957
    %v959 = vpop.xlane.xlu0 %958
    %v960 = vsel %vm908, %v955, -inf
    %961 = vmax.xlane.f32.xlu0 %v960
    %v962 = vpop.xlane.xlu0 %961
    %v963 = vsub.f32 %v953, %v959
    %v964 = vsub.f32 %v955, %v962
    %v965 = vmul.f32 %v963, 1.442695
    %v966 = vpow.pop %v965
    %v967 = vmul.f32 %v964, 1.442695
    %v968 = vpow.pop %v967
    %v969 = vsel %vm908, %v966, 0.0
    %970 = vadd.xlane.f32.xlu0 %v969
    %v971 = vpop.xlane.xlu0 %970
    %v972 = vsel %vm908, %v968, 0.0
    %973 = vadd.xlane.f32.xlu0 %v972
    %v974 = vpop.xlane.xlu0 %973
    %v975 = vrcp.pop %v971
    %v976 = vrcp.pop %v974
    %v977 = vmul.f32 %v966, %v975
    %v978 = vmul.f32 %v968, %v976
    %v979 = vsel %vm437, %v865, 0.0
    %v980 = vsel %vm437, %v867, 0.0
    %v981 = vsel %vm437, %v870, 0.0
    %v982 = vpack.c.bf16 %v978, %v977
    %v983 = vpack.c.bf16 %v980, %v979
    %v984 = vpack.c.bf16 %v981, %v981
    %v986 = vsel %vm908, %v982, 0
    %vm988 = vcmask 1043456
    %v990 = vsel %vm988, %v984, 0
    %992 = vmatpush.bf16.msra.mxu0 0
    %993 = vmatpush.bf16.msra.mxu0 0
    %994 = vmatpush.bf16.msra.mxu0 0
    %995 = vmatpush.bf16.msra.mxu0 0
    %996 = vmatpush.bf16.msra.mxu0 0
    %997 = vmatpush.bf16.msra.mxu0 0
    %998 = vmatpush.bf16.msra.mxu0 %v990
    %999 = vmatpush.bf16.msra.mxu0 %v983
    %1000 = vmatmul.bf16.gmra.mxu0 %v986
    %v1001 = vpop.f32.mrf.mxu0
    %v1002 = vadd.f32 0.0, %v1001
    %v1003 = vpop.f32.mrf.mxu0
    %v1004 = vadd.f32 0.0, %v1003
    %1005 = vdwg.mxu0
    %v1007 = vsel %vm908, %v934, 0
    %v1010 = vsel %vm988, %v936, 0
    %1012 = vmatpush.bf16.msra.mxu0 0
    %1013 = vmatpush.bf16.msra.mxu0 0
    %1014 = vmatpush.bf16.msra.mxu0 0
    %1015 = vmatpush.bf16.msra.mxu0 0
    %1016 = vmatpush.bf16.msra.mxu0 0
    %1017 = vmatpush.bf16.msra.mxu0 0
    %1018 = vmatpush.bf16.msra.mxu0 %v1010
    %1019 = vmatpush.bf16.msra.mxu0 %v935
    %1020 = vmatmul.bf16.gmra.mxu0 %v1007
    %v1021 = vpop.f32.mrf.mxu0
    %v1022 = vadd.f32 %v1002, %v1021
    %v1023 = vpop.f32.mrf.mxu0
    %v1024 = vadd.f32 %v1004, %v1023
    %1025 = vdwg.mxu0
    %v1026 = vsel %vm519, %v878, 0.0
    %v1027 = vsel %vm519, %v879, 0.0
    %v1028 = vpack.c.bf16 %v1027, %v1026
    %v1030 = vsel %vm307, %v1028, 0
    %1032 = vmatpush.bf16.xpose.msra.mxu0 0
    %1033 = vmatpush.bf16.xpose.msra.mxu0 0
    %1034 = vmatpush.bf16.xpose.msra.mxu0 0
    %1035 = vmatpush.bf16.xpose.msra.mxu0 0
    %1036 = vmatpush.bf16.xpose.msra.mxu0 0
    %1037 = vmatpush.bf16.xpose.msra.mxu0 0
    %1038 = vmatpush.bf16.xpose.msra.mxu0 %v892
    %1039 = vmatpush.bf16.xpose.msra.mxu0 %v889
    %1040 = vmatmul.bf16.gmra.mxu0 %v1030
    %v1041 = vpop.f32.mrf.mxu0
    %v1042 = vadd.f32 %v286, %v1041
    %v1043 = vpop.f32.mrf.mxu0
    %v1044 = vadd.f32 %v287, %v1043
    %1045 = vdwg.mxu0
    %v1046 = vsel %vm908, %v1042, -inf
    %1047 = vmax.xlane.f32.xlu0 %v1046
    %v1048 = vpop.xlane.xlu0 %1047
    %v1049 = vsel %vm908, %v1044, -inf
    %1050 = vmax.xlane.f32.xlu0 %v1049
    %v1051 = vpop.xlane.xlu0 %1050
    %v1052 = vsub.f32 %v1042, %v1048
    %v1053 = vsub.f32 %v1044, %v1051
    %v1054 = vmul.f32 %v1052, 1.442695
    %v1055 = vpow.pop %v1054
    %v1056 = vmul.f32 %v1053, 1.442695
    %v1057 = vpow.pop %v1056
    %v1058 = vsel %vm908, %v1055, 0.0
    %1059 = vadd.xlane.f32.xlu0 %v1058
    %v1060 = vpop.xlane.xlu0 %1059
    %v1061 = vsel %vm908, %v1057, 0.0
    %1062 = vadd.xlane.f32.xlu0 %v1061
    %v1063 = vpop.xlane.xlu0 %1062
    %v1064 = vrcp.pop %v1060
    %v1065 = vrcp.pop %v1063
    %v1066 = vmul.f32 %v1055, %v1064
    %v1067 = vmul.f32 %v1057, %v1065
    %v1068 = vsel %vm519, %v865, 0.0
    %v1069 = vsel %vm519, %v867, 0.0
    %v1070 = vsel %vm519, %v870, 0.0
    %v1071 = vpack.c.bf16 %v1067, %v1066
    %v1072 = vpack.c.bf16 %v1069, %v1068
    %v1073 = vpack.c.bf16 %v1070, %v1070
    %v1075 = vsel %vm908, %v1071, 0
    %v1078 = vsel %vm988, %v1073, 0
    %1080 = vmatpush.bf16.msra.mxu0 0
    %1081 = vmatpush.bf16.msra.mxu0 0
    %1082 = vmatpush.bf16.msra.mxu0 0
    %1083 = vmatpush.bf16.msra.mxu0 0
    %1084 = vmatpush.bf16.msra.mxu0 0
    %1085 = vmatpush.bf16.msra.mxu0 0
    %1086 = vmatpush.bf16.msra.mxu0 %v1078
    %1087 = vmatpush.bf16.msra.mxu0 %v1072
    %1088 = vmatmul.bf16.gmra.mxu0 %v1075
    %v1089 = vpop.f32.mrf.mxu0
    %v1090 = vadd.f32 0.0, %v1089
    %v1091 = vpop.f32.mrf.mxu0
    %v1092 = vadd.f32 0.0, %v1091
    %1093 = vdwg.mxu0
    %v1094 = vadd.f32 %v1022, %v1090
    %v1095 = vadd.f32 %v1024, %v1092
    %v1096 = vsel %vm586, %v878, 0.0
    %v1097 = vsel %vm586, %v879, 0.0
    %v1098 = vpack.c.bf16 %v1097, %v1096
    %v1100 = vsel %vm307, %v1098, 0
    %1102 = vmatpush.bf16.xpose.msra.mxu0 0
    %1103 = vmatpush.bf16.xpose.msra.mxu0 0
    %1104 = vmatpush.bf16.xpose.msra.mxu0 0
    %1105 = vmatpush.bf16.xpose.msra.mxu0 0
    %1106 = vmatpush.bf16.xpose.msra.mxu0 0
    %1107 = vmatpush.bf16.xpose.msra.mxu0 0
    %1108 = vmatpush.bf16.xpose.msra.mxu0 %v892
    %1109 = vmatpush.bf16.xpose.msra.mxu0 %v889
    %1110 = vmatmul.bf16.gmra.mxu0 %v1100
    %v1111 = vpop.f32.mrf.mxu0
    %v1112 = vadd.f32 %v286, %v1111
    %v1113 = vpop.f32.mrf.mxu0
    %v1114 = vadd.f32 %v287, %v1113
    %1115 = vdwg.mxu0
    %v1116 = vsel %vm908, %v1112, -inf
    %1117 = vmax.xlane.f32.xlu0 %v1116
    %v1118 = vpop.xlane.xlu0 %1117
    %v1119 = vsel %vm908, %v1114, -inf
    %1120 = vmax.xlane.f32.xlu0 %v1119
    %v1121 = vpop.xlane.xlu0 %1120
    %v1122 = vsub.f32 %v1112, %v1118
    %v1123 = vsub.f32 %v1114, %v1121
    %v1124 = vmul.f32 %v1122, 1.442695
    %v1125 = vpow.pop %v1124
    %v1126 = vmul.f32 %v1123, 1.442695
    %v1127 = vpow.pop %v1126
    %v1128 = vsel %vm908, %v1125, 0.0
    %1129 = vadd.xlane.f32.xlu0 %v1128
    %v1130 = vpop.xlane.xlu0 %1129
    %v1131 = vsel %vm908, %v1127, 0.0
    %1132 = vadd.xlane.f32.xlu0 %v1131
    %v1133 = vpop.xlane.xlu0 %1132
    %v1134 = vrcp.pop %v1130
    %v1135 = vrcp.pop %v1133
    %v1136 = vmul.f32 %v1125, %v1134
    %v1137 = vmul.f32 %v1127, %v1135
    %v1138 = vsel %vm586, %v865, 0.0
    %v1139 = vsel %vm586, %v867, 0.0
    %v1140 = vsel %vm586, %v870, 0.0
    %v1141 = vpack.c.bf16 %v1137, %v1136
    %v1142 = vpack.c.bf16 %v1139, %v1138
    %v1143 = vpack.c.bf16 %v1140, %v1140
    %v1145 = vsel %vm908, %v1141, 0
    %v1148 = vsel %vm988, %v1143, 0
    %1150 = vmatpush.bf16.msra.mxu0 0
    %1151 = vmatpush.bf16.msra.mxu0 0
    %1152 = vmatpush.bf16.msra.mxu0 0
    %1153 = vmatpush.bf16.msra.mxu0 0
    %1154 = vmatpush.bf16.msra.mxu0 0
    %1155 = vmatpush.bf16.msra.mxu0 0
    %1156 = vmatpush.bf16.msra.mxu0 %v1148
    %1157 = vmatpush.bf16.msra.mxu0 %v1142
    %1158 = vmatmul.bf16.gmra.mxu0 %v1145
    %v1159 = vpop.f32.mrf.mxu0
    %v1160 = vadd.f32 0.0, %v1159
    %v1161 = vpop.f32.mrf.mxu0
    %v1162 = vadd.f32 0.0, %v1161
    %1163 = vdwg.mxu0
    %v1164 = vadd.f32 %v1094, %v1160
    %v1165 = vadd.f32 %v1095, %v1162
    %v1166 = vpack.c.bf16 %v1165, %v1164
    %v1167 = vperm.slane %v877, 0
    %v1172 = vunpack.c.l.b16 %v873
    %v1173 = vunpack.c.l.b16 %v874
    %v1174 = vunpack.c.l.b16 %v875
    %v1175 = vunpack.c.l.b16 %v876
    %v1176 = vpack.c.b16 %v1173, %v1172
    %v1177 = vpack.c.b16 %v1175, %v1174
    %v1181 = vsel %vm307, %v1166, 0
    %1183 = vmatpush.bf16.msra.mxu0 0
    %1184 = vmatpush.bf16.msra.mxu0 0
    %1185 = vmatpush.bf16.msra.mxu0 0
    %1186 = vmatpush.bf16.msra.mxu0 0
    %1187 = vmatpush.bf16.msra.mxu0 0
    %1188 = vmatpush.bf16.msra.mxu0 0
    %1189 = vmatpush.bf16.msra.mxu0 %v1177
    %1190 = vmatpush.bf16.msra.mxu0 %v1176
    %1191 = vmatmul.bf16.gmra.mxu0 %v1181
    %v1192 = vpop.f32.mrf.mxu0
    %v1193 = vadd.f32 %v1167, %v1192
    %v1194 = vpop.f32.mrf.mxu0
    %v1195 = vadd.f32 %v1167, %v1194
    %1196 = vdwg.mxu0
    %v1197 = vadd.f32 %v742, %v1193
    %v1198 = vadd.f32 %v743, %v1195
    %v1199 = vld [vmem:[#allocation22 + $0xa] sm:$0x1]
    %v1200 = vld [vmem:[#allocation22 + $0xb] sm:$0x1]
    %v1201 = vsel %vm307, %v1197, 0.0
    %1202 = vadd.xlane.f32.xlu0 %v1201
    %v1203 = vpop.xlane.xlu0 %1202
    %v1204 = vsel %vm307, %v1198, 0.0
    %1205 = vadd.xlane.f32.xlu0 %v1204
    %v1206 = vpop.xlane.xlu0 %1205
    %v1207 = vmul.f32 %v1203, %v699
    %v1208 = vmul.f32 %v1206, %v699
    %v1209 = vsub.f32 %v1197, %v1207
    %v1210 = vsub.f32 %v1198, %v1208
    %v1211 = vmul.f32 %v1209, %v1209
    %v1212 = vmul.f32 %v1210, %v1210
    %v1213 = vsel %vm307, %v1211, 0.0
    %1214 = vadd.xlane.f32.xlu0 %v1213
    %v1215 = vpop.xlane.xlu0 %1214
    %v1216 = vsel %vm307, %v1212, 0.0
    %1217 = vadd.xlane.f32.xlu0 %v1216
    %v1218 = vpop.xlane.xlu0 %1217
    %v1219 = vmul.f32 %v1215, %v699
    %v1220 = vmul.f32 %v1218, %v699
    %v1221 = vadd.f32 %v1219, 1e-05
    %v1222 = vadd.f32 %v1220, 1e-05
    %v1223 = vrsqrt.pop %v1221
    %v1224 = vmul.f32 %v1223, %v1221
    %v1225 = vmul.f32 %v1224, %v1223
    %v1226 = vmul.f32 0.5, %v1225
    %v1227 = vsub.f32 1.5, %v1226
    %v1228 = vmul.f32 %v1223, %v1227
    %vm1229 = vweird.f32 %v1221
    %vm1230 = vweird.f32 %v1223
    %vm1231 = vmor %vm1229, %vm1230
    %v1232 = vsel %vm1231, %v1223, %v1228
    %v1233 = vrsqrt.pop %v1222
    %v1234 = vmul.f32 %v1233, %v1222
    %v1235 = vmul.f32 %v1234, %v1233
    %v1236 = vmul.f32 0.5, %v1235
    %v1237 = vsub.f32 1.5, %v1236
    %v1238 = vmul.f32 %v1233, %v1237
    %vm1239 = vweird.f32 %v1222
    %vm1240 = vweird.f32 %v1233
    %vm1241 = vmor %vm1239, %vm1240
    %v1242 = vsel %vm1241, %v1233, %v1238
    %v1243 = vmul.f32 %v1209, %v1232
    %v1244 = vmul.f32 %v1210, %v1242
    %v1245 = vperm.slane %v1199, 0
    %v1246 = vmul.f32 %v1243, %v1245
    %v1247 = vmul.f32 %v1244, %v1245
    %v1248 = vperm.slane %v1200, 0
    %v1249 = vadd.f32 %v1246, %v1248
    %v1250 = vadd.f32 %v1247, %v1248
    %v1251 = vld [vmem:[#allocation20] sm:$0xf]
    %v1252 = vld [vmem:[#allocation20 + $0x4] sm:$0xf]
    %v1253 = vld [vmem:[#allocation20 + $0x8] sm:$0xf]
    %v1254 = vld [vmem:[#allocation20 + $0xc] sm:$0xf]
    %v1255 = vpack.c.bf16 %v1250, %v1249
    %v1256 = vld [vmem:[%s16] sm:$0x1]
    %v1258 = vperm.slane %v1256, 0
    %v1264 = vunpack.c.l.b16 %v1251
    %v1265 = vunpack.c.l.b16 %v1252
    %v1266 = vunpack.c.l.b16 %v1253
    %v1267 = vunpack.c.l.b16 %v1254
    %v1268 = vpack.c.b16 %v1265, %v1264
    %v1269 = vpack.c.b16 %v1267, %v1266
    %v1273 = vsel %vm307, %v1255, 0
    %1275 = vmatpush.bf16.msra.mxu0 0
    %1276 = vmatpush.bf16.msra.mxu0 0
    %1277 = vmatpush.bf16.msra.mxu0 0
    %1278 = vmatpush.bf16.msra.mxu0 0
    %1279 = vmatpush.bf16.msra.mxu0 0
    %1280 = vmatpush.bf16.msra.mxu0 0
    %1281 = vmatpush.bf16.msra.mxu0 %v1269
    %1282 = vmatpush.bf16.msra.mxu0 %v1268
    %1283 = vmatmul.bf16.gmra.mxu0 %v1273
    %v1284 = vpop.f32.mrf.mxu0
    %v1285 = vadd.f32 %v1258, %v1284
    %v1286 = vpop.f32.mrf.mxu0
    %v1287 = vadd.f32 %v1258, %v1286
    %1288 = vdwg.mxu0
    %v1289 = vmax.f32 %v1285, 0.0
    %v1290 = vmax.f32 %v1287, 0.0
    %v1291 = vld [vmem:[%s14] sm:$0xf]
    %v1292 = vld [vmem:[%s14 + $0x4] sm:$0xf]
    %v1293 = vld [vmem:[%s14 + $0x8] sm:$0xf]
    %v1294 = vld [vmem:[%s14 + $0xc] sm:$0xf]
    %v1295 = vld [vmem:[%s14 + $0x10] sm:$0xf]
    %v1296 = vld [vmem:[%s14 + $0x14] sm:$0xf]
    %v1297 = vld [vmem:[%s14 + $0x18] sm:$0xf]
    %v1298 = vld [vmem:[%s14 + $0x1c] sm:$0xf]
    %v1299 = vpack.c.bf16 %v1290, %v1289
    %v1300 = vld [vmem:[#allocation22 + $0xe] sm:$0x1]
    %v1301 = vperm.slane %v1300, 0
    %v1310 = vunpack.c.l.b16 %v1291
    %v1311 = vunpack.c.l.b16 %v1292
    %v1312 = vunpack.c.l.b16 %v1293
    %v1313 = vunpack.c.l.b16 %v1294
    %v1314 = vunpack.c.l.b16 %v1295
    %v1315 = vunpack.c.l.b16 %v1296
    %v1316 = vunpack.c.l.b16 %v1297
    %v1317 = vunpack.c.l.b16 %v1298
    %v1318 = vpack.c.b16 %v1311, %v1310
    %v1319 = vpack.c.b16 %v1313, %v1312
    %v1320 = vpack.c.b16 %v1315, %v1314
    %v1321 = vpack.c.b16 %v1317, %v1316
    %vm1326 = vcmask 523264
    %v1328 = vsel %vm1326, %v1299, 0
    %1330 = vmatpush.bf16.msra.mxu0 0
    %1331 = vmatpush.bf16.msra.mxu0 0
    %1332 = vmatpush.bf16.msra.mxu0 0
    %1333 = vmatpush.bf16.msra.mxu0 0
    %1334 = vmatpush.bf16.msra.mxu0 %v1321
    %1335 = vmatpush.bf16.msra.mxu0 %v1320
    %1336 = vmatpush.bf16.msra.mxu0 %v1319
    %1337 = vmatpush.bf16.msra.mxu0 %v1318
    %1338 = vmatmul.bf16.gmra.mxu0 %v1328
    %v1339 = vpop.f32.mrf.mxu0
    %v1340 = vadd.f32 %v1301, %v1339
    %v1341 = vpop.f32.mrf.mxu0
    %v1342 = vadd.f32 %v1301, %v1341
    %1343 = vdwg.mxu0
    %v1344 = vadd.f32 %v1249, %v1340
    %v1345 = vadd.f32 %v1250, %v1342
    %v1346 = vld [vmem:[#allocation22 + $0xc] sm:$0x1]
    %v1347 = vld [vmem:[#allocation22 + $0xd] sm:$0x1]
    %v1348 = vsel %vm307, %v1344, 0.0
    %1349 = vadd.xlane.f32.xlu0 %v1348
    %v1350 = vpop.xlane.xlu0 %1349
    %v1351 = vsel %vm307, %v1345, 0.0
    %1352 = vadd.xlane.f32.xlu0 %v1351
    %v1353 = vpop.xlane.xlu0 %1352
    %v1354 = vmul.f32 %v1350, %v699
    %v1355 = vmul.f32 %v1353, %v699
    %v1356 = vsub.f32 %v1344, %v1354
    %v1357 = vsub.f32 %v1345, %v1355
    %v1358 = vmul.f32 %v1356, %v1356
    %v1359 = vmul.f32 %v1357, %v1357
    %v1360 = vsel %vm307, %v1358, 0.0
    %1361 = vadd.xlane.f32.xlu0 %v1360
    %v1362 = vpop.xlane.xlu0 %1361
    %v1363 = vsel %vm307, %v1359, 0.0
    %1364 = vadd.xlane.f32.xlu0 %v1363
    %v1365 = vpop.xlane.xlu0 %1364
    %v1366 = vmul.f32 %v1362, %v699
    %v1367 = vmul.f32 %v1365, %v699
    %v1368 = vadd.f32 %v1366, 1e-05
    %v1369 = vadd.f32 %v1367, 1e-05
    %v1370 = vrsqrt.pop %v1368
    %v1371 = vmul.f32 %v1370, %v1368
    %v1372 = vmul.f32 %v1371, %v1370
    %v1373 = vmul.f32 0.5, %v1372
    %v1374 = vsub.f32 1.5, %v1373
    %v1375 = vmul.f32 %v1370, %v1374
    %vm1376 = vweird.f32 %v1368
    %vm1377 = vweird.f32 %v1370
    %vm1378 = vmor %vm1376, %vm1377
    %v1379 = vsel %vm1378, %v1370, %v1375
    %v1380 = vrsqrt.pop %v1369
    %v1381 = vmul.f32 %v1380, %v1369
    %v1382 = vmul.f32 %v1381, %v1380
    %v1383 = vmul.f32 0.5, %v1382
    %v1384 = vsub.f32 1.5, %v1383
    %v1385 = vmul.f32 %v1380, %v1384
    %vm1386 = vweird.f32 %v1369
    %vm1387 = vweird.f32 %v1380
    %vm1388 = vmor %vm1386, %vm1387
    %v1389 = vsel %vm1388, %v1380, %v1385
    %v1390 = vmul.f32 %v1356, %v1379
    %v1391 = vmul.f32 %v1357, %v1389
    %v1392 = vperm.slane %v1346, 0
    %v1393 = vmul.f32 %v1390, %v1392
    %v1394 = vmul.f32 %v1391, %v1392
    %v1395 = vperm.slane %v1347, 0
    %v1396 = vadd.f32 %v1393, %v1395
    %v1397 = vadd.f32 %v1394, %v1395
    %1398 = vst.msk [vmem:[#allocation23] sm:$0xff] %vm307, %v1396
    %1399 = vst.msk [vmem:[#allocation23 + $0x8] sm:$0xff] %vm307, %v1397
    // Predicated region
    $region122: #{tpu_custom_call.1} parent=1 // pred_check
      _
    $region123: #{tpu_custom_call.1} parent=1 // pred_check_branch
      %1401 = sbr.rel (0) target = $region125
    $region124: #{tpu_custom_call.1} parent=1 // pred_region
      %1403 = vsyncadd [#allocation4], 0
      %s1404 = sshll.u32 [#allocation23], 4
      %s1405 = int_to_ptr.vmem [resolvable:$true] %s1404
      %s1406 = sshll.u32 %s17, 4
      %s1407 = int_to_ptr.hbm [resolvable:$true] %s1406
      %1412 = dma.vmem_to_hbm [thread:$0]  %s1405, 256, %s1407, [#allocation4], 128, 128, 8
    $region125: #{tpu_custom_call.1} parent=1 // pred_fallthru
      _
    // Predicated region
    $region126: #{tpu_custom_call.1} parent=1 // pred_check
      _
    $region127: #{tpu_custom_call.1} parent=1 // pred_check_branch
      %1414 = sbr.rel (0) target = $region129
    $region128: #{tpu_custom_call.1} parent=1 // pred_region
      %1416 = dma.done [#allocation4], 256
    $region129: #{tpu_custom_call.1} parent=1 // pred_fallthru
      _
    %1417 = vsyncpa [#allocation3], 1
    %1418 = vsyncpa [#allocation6], 1
    %1419 = vsyncpa [#allocation9], 1
    %1420 = vsyncpa [#allocation12], 1
    %1421 = vsyncpa [#allocation15], 1
    %1422 = vsyncpa [#allocation18], 1
    %1423 = vsyncpa [#allocation21], 1
    %1424 = vsyncpa [#allocation4], 1

</llo_original>
